<compile_context>
chip_gen: v5e
topology: v5e:2x2
jax: 0.10.0
libtpu: 0.0.40
codegen_flags: <defaults>
</compile_context>

<pallas_src>
import dataclasses
import functools

import jax
import jax.numpy as jnp
from jax.experimental import pallas as pl
from jax.experimental.pallas import tpu as pltpu


# ----------------------------------------------------------------------------
# Fused Pallas kernel: conv(as GEMM)+ReLU -> linear encoder -> L2 norm -> temp
# ----------------------------------------------------------------------------
def _fused_forward_kernel(scale_ref, patches_ref, wconv_ref, bconv_ref,
                          wenc_ref, benc_ref, feats_ref, embs_ref,
                          *, normalize, learnable_temp):
    """Whole forward for one group of images (one grid step).

    scale_ref   : (1, 1)          logit_scale
    patches_ref : (1, G, K, P)    im2col patches (K = C*9 padded, P = H'*W')
    wconv_ref   : (F, K)          conv weight, (c, kh, kw)-major columns
    bconv_ref   : (F, P)          conv bias, pre-broadcast over P
    wenc_ref    : (F, P, E)       encoder weight, torch row order (c, h', w')
    benc_ref    : (1, E)          encoder bias
    feats_ref   : (1, G, F, P)    backbone features (torch flatten order)
    embs_ref    : (1, G, E)       normalized, temperature-scaled embeddings
    """
    g_dim = patches_ref.shape[1]
    f_dim = wconv_ref.shape[0]

    w_conv = wconv_ref[...]                 # (F, K)
    b_conv = bconv_ref[...]                 # (F, P)
    w_enc = wenc_ref[...]                   # (F, P, E)  (hoisted once)
    b_enc = benc_ref[...]                   # (1, E)
    scale = jnp.exp(scale_ref[...])         # (1, 1)

    emb_rows = []
    for g in range(g_dim):
        # --- backbone: conv as transposed GEMM, output already channel-major
        patch = patches_ref[0, g]                                   # (K, P)
        conv = jnp.dot(w_conv, patch, preferred_element_type=jnp.float32)
        conv = jnp.maximum(conv + b_conv, 0.0)                      # (F, P)
        feats_ref[0, g] = conv.astype(feats_ref.dtype)

        # --- encoder: embs = feats_flat @ W_enc + b, as a sum of per-channel
        #     (1,P)@(P,E) dots (no in-kernel reshape/relayout needed).
        z = b_enc                                                   # (1, E)
        for f in range(f_dim):
            z = z + jnp.dot(conv[f:f + 1, :], w_enc[f],
                            preferred_element_type=jnp.float32)

        if normalize:
            # eps matches torch: z / (||z||_2 + 1e-7); reciprocal on the EUP.
            norm = jnp.sqrt(jnp.sum(z * z, axis=-1, keepdims=True))
            z = z * pl.reciprocal(norm + 1e-7, approx=True)
        if learnable_temp:
            z = scale * z
        emb_rows.append(z)

    embs_ref[0] = jnp.concatenate(emb_rows, axis=0).astype(embs_ref.dtype)


def fused_forward_pallas(logit_scale, patches, w_conv, b_conv, w_enc, b_enc,
                         *, normalize=True, learnable_temp=True):
    """patches: (n_blk, G, K, P); returns feats (n_blk,G,F,P), embs (n_blk,G,E)."""
    n_blk, grp, k_dim, p_dim = patches.shape
    f_dim = w_conv.shape[0]
    e_dim = w_enc.shape[-1]

    kernel = functools.partial(_fused_forward_kernel,
                               normalize=normalize,
                               learnable_temp=learnable_temp)
    feats, embs = pl.pallas_call(
        kernel,
        out_shape=(
            jax.ShapeDtypeStruct((n_blk, grp, f_dim, p_dim), jnp.float32),
            jax.ShapeDtypeStruct((n_blk, grp, e_dim), jnp.float32),
        ),
        grid=(n_blk,),
        in_specs=[
            pl.BlockSpec((1, 1), lambda i: (0, 0)),                        # logit_scale
            pl.BlockSpec((1, grp, k_dim, p_dim), lambda i: (i, 0, 0, 0)),  # patches
            pl.BlockSpec((f_dim, k_dim), lambda i: (0, 0)),                # w_conv
            pl.BlockSpec((f_dim, p_dim), lambda i: (0, 0)),                # b_conv
            pl.BlockSpec((f_dim, p_dim, e_dim), lambda i: (0, 0, 0)),      # w_enc
            pl.BlockSpec((1, e_dim), lambda i: (0, 0)),                    # b_enc
        ],
        out_specs=(
            pl.BlockSpec((1, grp, f_dim, p_dim), lambda i: (i, 0, 0, 0)),
            pl.BlockSpec((1, grp, e_dim), lambda i: (i, 0, 0)),
        ),
        compiler_params=pltpu.CompilerParams(
            dimension_semantics=("parallel",)),
    )(logit_scale, patches, w_conv, b_conv, w_enc, b_enc)
    return feats, embs


# ----------------------------------------------------------------------------
# Plain-JAX glue: im2col for the 3x3 / stride-2 / pad-1 conv (channel-major
# rows, matching torch weight.reshape(F, C*3*3)).
# ----------------------------------------------------------------------------
def im2col_chw(x, k=3, stride=2, pad=1):
    """(N, C, H, W) -> (N, C*k*k, H'*W') patches, (c, kh, kw)-major rows."""
    n, c, h, w = x.shape
    h_out = (h + 2 * pad - k) // stride + 1
    w_out = (w + 2 * pad - k) // stride + 1
    xp = jnp.pad(x, ((0, 0), (0, 0), (pad, pad), (pad, pad)))
    cols = []
    for kh in range(k):
        for kw in range(k):
            cols.append(xp[:, :, kh:kh + stride * h_out:stride,
                           kw:kw + stride * w_out:stride])
    patches = jnp.stack(cols, axis=2)                   # (N, C, 9, H', W')
    patches = patches.reshape(n, c * k * k, h_out * w_out)
    return patches, h_out, w_out


@functools.partial(jax.jit,
                   static_argnames=("ck_pad", "n_blk", "normalize",
                                    "learnable_temp"))
def _forward_impl(x, w_conv_mat, b_conv_bc, w_enc_r, b_enc_row, logit_scale,
                  *, ck_pad, n_blk, normalize, learnable_temp):
    b, t, c, h, w = x.shape
    n = b * t
    x_flat = x.reshape(n, c, h, w)

    patches, h_out, w_out = im2col_chw(x_flat)          # (N, C*9, P)
    patches = jnp.pad(patches, ((0, 0), (0, ck_pad - c * 9), (0, 0)))
    grp = n // n_blk
    patches = patches.reshape(n_blk, grp, ck_pad, h_out * w_out)

    feats, embs = fused_forward_pallas(
        logit_scale, patches, w_conv_mat, b_conv_bc, w_enc_r, b_enc_row,
        normalize=normalize, learnable_temp=learnable_temp)

    # (n_blk, grp, F, P) is already torch's (c, h', w') flatten order per
    # image -> pure metadata reshapes, no transpose.
    feats = feats.reshape(b, t, -1)
    embs = embs.reshape(b, t, -1)
    return feats, embs


# ----------------------------------------------------------------------------
# Model
# ----------------------------------------------------------------------------
@dataclasses.dataclass
class SelfSupervisedOutput:
    frames: jnp.ndarray
    feats: jnp.ndarray
    embs: jnp.ndarray


class SelfSupervisedModelPallas:
    def __init__(self, num_ctx_frames=2, normalize_embeddings=True,
                 learnable_temp=True, num_history_frames=1,
                 in_channels=3, conv_channels=8, emb_dim=32,
                 img_hw=16, key=jax.random.PRNGKey(0)):
        self.num_ctx_frames = num_ctx_frames
        self.normalize_embeddings = normalize_embeddings
        self.learnable_temp = learnable_temp
        self.num_history_frames = num_history_frames
        self.in_channels = in_channels
        self.conv_channels = conv_channels
        self.emb_dim = emb_dim

        k1, k2, k3, k4 = jax.random.split(key, 4)
        f, c = conv_channels, in_channels
        # backbone: Conv2d(c, f, 3, stride=2, padding=1) + ReLU
        self.w_conv = 0.1 * jax.random.normal(k1, (f, c, 3, 3), jnp.float32)
        self.b_conv = 0.1 * jax.random.normal(k2, (f,), jnp.float32)
        h_out = (img_hw + 2 - 3) // 2 + 1
        self.p_dim = h_out * h_out
        feat_dim = f * self.p_dim
        # encoder: Linear(feat_dim, emb_dim)
        self.w_enc = 0.05 * jax.random.normal(k3, (feat_dim, emb_dim), jnp.float32)
        self.b_enc = 0.05 * jax.random.normal(k4, (emb_dim,), jnp.float32)
        # logit_scale = nn.Parameter(torch.ones([]))
        self.logit_scale = jnp.ones((1, 1), jnp.float32)

        # --- one-time kernel-friendly repacking of the parameters ---
        ck = c * 9
        self.ck_pad = ((ck + 7) // 8) * 8                 # 27 -> 32
        w_mat = self.w_conv.reshape(f, ck)                # torch (c,kh,kw) cols
        self.w_conv_mat = jnp.pad(w_mat, ((0, 0), (0, self.ck_pad - ck)))
        self.b_conv_bc = jnp.asarray(
            jnp.broadcast_to(self.b_conv[:, None], (f, self.p_dim)),
            jnp.float32)
        # encoder weight rows are already in torch flatten order (c, h', w')
        # -> just reshape to (F, P, E); consumed per channel inside the kernel.
        self.w_enc_r = self.w_enc.reshape(f, self.p_dim, emb_dim)
        self.b_enc_row = self.b_enc.reshape(1, emb_dim)

    def forward(self, x):
        # x: (B, T, C, H, W), NCHW frames (PyTorch convention).
        b, t = x.shape[0], x.shape[1]
        n = b * t
        n_blk = 2 if n % 2 == 0 else 1   # 2 "parallel" groups -> both v7x TCs
        feats, embs = _forward_impl(
            x, self.w_conv_mat, self.b_conv_bc, self.w_enc_r, self.b_enc_row,
            self.logit_scale, ck_pad=self.ck_pad, n_blk=n_blk,
            normalize=self.normalize_embeddings,
            learnable_temp=self.learnable_temp)
        return SelfSupervisedOutput(frames=x, feats=feats, embs=embs)


# ----------------------------------------------------------------------------
if __name__ == "__main__":
    key = jax.random.PRNGKey(0)
    B, S, X = 2, 2, 2            # S video frames, X context frames
    T = S * X                    # T = 4
    C, H, W = 3, 16, 16
    x = jax.random.normal(key, (B, T, C, H, W), jnp.float32)

    model = SelfSupervisedModelPallas(
        num_ctx_frames=X, normalize_embeddings=True, learnable_temp=True,
        num_history_frames=1, in_channels=C, conv_channels=8, emb_dim=32,
        img_hw=H, key=jax.random.PRNGKey(0))

    out = model.forward(x)
    jax.block_until_ready(out.embs)
    jax.block_until_ready(out.feats)

    assert out.frames.shape == (B, T, C, H, W)
    assert out.feats.shape == (B, T, 8 * 8 * 8)
    assert out.embs.shape == (B, T, 32)
    print("KERNEL_OK")
</pallas_src>

<mosaic_0001>
module attributes {stable_mosaic.version = 11 : i64} {
  func.func @_fused_forward_kernel(%arg0: i32, %arg1: memref<1x1xf32, #tpu.memory_space<vmem>>, %arg2: memref<1x4x32x64xf32, #tpu.memory_space<vmem>>, %arg3: memref<8x32xf32, #tpu.memory_space<vmem>>, %arg4: memref<8x64xf32, #tpu.memory_space<vmem>>, %arg5: memref<8x64x32xf32, #tpu.memory_space<vmem>>, %arg6: memref<1x32xf32, #tpu.memory_space<vmem>>, %arg7: memref<1x4x8x64xf32, #tpu.memory_space<vmem>>, %arg8: memref<1x4x32xf32, #tpu.memory_space<vmem>>) attributes {dimension_semantics = [#tpu.dimension_semantics<parallel>], iteration_bounds = array<i64: 2>, scalar_prefetch = 0 : i64, scratch_operands = 0 : i64, tpu.core_type = #tpu.core_type<tc>, window_params = [{pipeline_mode = #tpu.pipeline_mode<synchronous>, transform_indices = @transform_0, window_bounds = array<i64: 1, 1>}, {transform_indices = @transform_1, window_bounds = array<i64: 1, 4, 32, 64>}, {pipeline_mode = #tpu.pipeline_mode<synchronous>, transform_indices = @transform_2, window_bounds = array<i64: 8, 32>}, {pipeline_mode = #tpu.pipeline_mode<synchronous>, transform_indices = @transform_3, window_bounds = array<i64: 8, 64>}, {pipeline_mode = #tpu.pipeline_mode<synchronous>, transform_indices = @transform_4, window_bounds = array<i64: 8, 64, 32>}, {pipeline_mode = #tpu.pipeline_mode<synchronous>, transform_indices = @transform_5, window_bounds = array<i64: 1, 32>}, {transform_indices = @transform_6, window_bounds = array<i64: 1, 4, 8, 64>}, {transform_indices = @transform_7, window_bounds = array<i64: 1, 4, 32>}]} {
    %c0 = arith.constant 0 : index
    %c0_0 = arith.constant 0 : index
    %0 = vector.load %arg3[%c0, %c0_0] : memref<8x32xf32, #tpu.memory_space<vmem>>, vector<8x32xf32>
    %c0_1 = arith.constant 0 : index
    %c0_2 = arith.constant 0 : index
    %1 = vector.load %arg4[%c0_1, %c0_2] : memref<8x64xf32, #tpu.memory_space<vmem>>, vector<8x64xf32>
    %c0_3 = arith.constant 0 : index
    %c0_4 = arith.constant 0 : index
    %c0_5 = arith.constant 0 : index
    %2 = vector.load %arg5[%c0_3, %c0_4, %c0_5] : memref<8x64x32xf32, #tpu.memory_space<vmem>>, vector<8x64x32xf32>
    %c0_6 = arith.constant 0 : index
    %c0_7 = arith.constant 0 : index
    %3 = vector.load %arg6[%c0_6, %c0_7] : memref<1x32xf32, #tpu.memory_space<vmem>>, vector<1x32xf32>
    %c0_8 = arith.constant 0 : index
    %c0_9 = arith.constant 0 : index
    %4 = vector.load %arg1[%c0_8, %c0_9] : memref<1x1xf32, #tpu.memory_space<vmem>>, vector<1x1xf32>
    %5 = math.exp %4 : vector<1x1xf32>
    %c0_10 = arith.constant 0 : index
    %c0_11 = arith.constant 0 : index
    %c0_12 = arith.constant 0 : index
    %c0_13 = arith.constant 0 : index
    %6 = vector.load %arg2[%c0_10, %c0_11, %c0_12, %c0_13] : memref<1x4x32x64xf32, #tpu.memory_space<vmem>>, vector<1x1x32x64xf32>
    %7 = vector.shape_cast %6 : vector<1x1x32x64xf32> to vector<32x64xf32>
    %cst = arith.constant dense<0.000000e+00> : vector<8x64xf32>
    %8 = tpu.matmul %0, %7, %cst {dimension_numbers = #tpu.dot_dimension_numbers<[1], [0], [0], [1], [0, 0, 1, 1], [], []>} : vector<8x32xf32>, vector<32x64xf32>, vector<8x64xf32> -> vector<8x64xf32>
    %9 = arith.addf %8, %1 : vector<8x64xf32>
    %cst_14 = arith.constant 0.000000e+00 : f32
    %10 = vector.broadcast %cst_14 : f32 to vector<8x64xf32>
    %11 = arith.maximumf %9, %10 : vector<8x64xf32>
    %c0_15 = arith.constant 0 : index
    %c0_16 = arith.constant 0 : index
    %c0_17 = arith.constant 0 : index
    %c0_18 = arith.constant 0 : index
    %12 = vector.load %arg7[%c0_15, %c0_16, %c0_17, %c0_18] : memref<1x4x8x64xf32, #tpu.memory_space<vmem>>, vector<1x1x8x64xf32>
    %13 = vector.shape_cast %12 : vector<1x1x8x64xf32> to vector<8x64xf32>
    %14 = vector.shape_cast %11 : vector<8x64xf32> to vector<1x1x8x64xf32>
    tpu.vector_store %arg7[%c0_15, %c0_16, %c0_17, %c0_18], %14 {strides = array<i32>} : memref<1x4x8x64xf32, #tpu.memory_space<vmem>>, vector<1x1x8x64xf32>,
    %15 = vector.extract_strided_slice %11 {offsets = [0, 0], sizes = [1, 64], strides = [1, 1]} : vector<8x64xf32> to vector<1x64xf32>
    %16 = vector.extract_strided_slice %2 {offsets = [0, 0, 0], sizes = [1, 64, 32], strides = [1, 1, 1]} : vector<8x64x32xf32> to vector<1x64x32xf32>
    %17 = vector.shape_cast %16 : vector<1x64x32xf32> to vector<64x32xf32>
    %cst_19 = arith.constant dense<0.000000e+00> : vector<1x32xf32>
    %18 = tpu.matmul %15, %17, %cst_19 {dimension_numbers = #tpu.dot_dimension_numbers<[1], [0], [0], [1], [0, 0, 1, 1], [], []>} : vector<1x64xf32>, vector<64x32xf32>, vector<1x32xf32> -> vector<1x32xf32>
    %19 = arith.addf %3, %18 : vector<1x32xf32>
    %20 = vector.extract_strided_slice %11 {offsets = [1, 0], sizes = [1, 64], strides = [1, 1]} : vector<8x64xf32> to vector<1x64xf32>
    %21 = vector.extract_strided_slice %2 {offsets = [1, 0, 0], sizes = [1, 64, 32], strides = [1, 1, 1]} : vector<8x64x32xf32> to vector<1x64x32xf32>
    %22 = vector.shape_cast %21 : vector<1x64x32xf32> to vector<64x32xf32>
    %cst_20 = arith.constant dense<0.000000e+00> : vector<1x32xf32>
    %23 = tpu.matmul %20, %22, %cst_20 {dimension_numbers = #tpu.dot_dimension_numbers<[1], [0], [0], [1], [0, 0, 1, 1], [], []>} : vector<1x64xf32>, vector<64x32xf32>, vector<1x32xf32> -> vector<1x32xf32>
    %24 = arith.addf %19, %23 : vector<1x32xf32>
    %25 = vector.extract_strided_slice %11 {offsets = [2, 0], sizes = [1, 64], strides = [1, 1]} : vector<8x64xf32> to vector<1x64xf32>
    %26 = vector.extract_strided_slice %2 {offsets = [2, 0, 0], sizes = [1, 64, 32], strides = [1, 1, 1]} : vector<8x64x32xf32> to vector<1x64x32xf32>
    %27 = vector.shape_cast %26 : vector<1x64x32xf32> to vector<64x32xf32>
    %cst_21 = arith.constant dense<0.000000e+00> : vector<1x32xf32>
    %28 = tpu.matmul %25, %27, %cst_21 {dimension_numbers = #tpu.dot_dimension_numbers<[1], [0], [0], [1], [0, 0, 1, 1], [], []>} : vector<1x64xf32>, vector<64x32xf32>, vector<1x32xf32> -> vector<1x32xf32>
    %29 = arith.addf %24, %28 : vector<1x32xf32>
    %30 = vector.extract_strided_slice %11 {offsets = [3, 0], sizes = [1, 64], strides = [1, 1]} : vector<8x64xf32> to vector<1x64xf32>
    %31 = vector.extract_strided_slice %2 {offsets = [3, 0, 0], sizes = [1, 64, 32], strides = [1, 1, 1]} : vector<8x64x32xf32> to vector<1x64x32xf32>
    %32 = vector.shape_cast %31 : vector<1x64x32xf32> to vector<64x32xf32>
    %cst_22 = arith.constant dense<0.000000e+00> : vector<1x32xf32>
    %33 = tpu.matmul %30, %32, %cst_22 {dimension_numbers = #tpu.dot_dimension_numbers<[1], [0], [0], [1], [0, 0, 1, 1], [], []>} : vector<1x64xf32>, vector<64x32xf32>, vector<1x32xf32> -> vector<1x32xf32>
    %34 = arith.addf %29, %33 : vector<1x32xf32>
    %35 = vector.extract_strided_slice %11 {offsets = [4, 0], sizes = [1, 64], strides = [1, 1]} : vector<8x64xf32> to vector<1x64xf32>
    %36 = vector.extract_strided_slice %2 {offsets = [4, 0, 0], sizes = [1, 64, 32], strides = [1, 1, 1]} : vector<8x64x32xf32> to vector<1x64x32xf32>
    %37 = vector.shape_cast %36 : vector<1x64x32xf32> to vector<64x32xf32>
    %cst_23 = arith.constant dense<0.000000e+00> : vector<1x32xf32>
    %38 = tpu.matmul %35, %37, %cst_23 {dimension_numbers = #tpu.dot_dimension_numbers<[1], [0], [0], [1], [0, 0, 1, 1], [], []>} : vector<1x64xf32>, vector<64x32xf32>, vector<1x32xf32> -> vector<1x32xf32>
    %39 = arith.addf %34, %38 : vector<1x32xf32>
    %40 = vector.extract_strided_slice %11 {offsets = [5, 0], sizes = [1, 64], strides = [1, 1]} : vector<8x64xf32> to vector<1x64xf32>
    %41 = vector.extract_strided_slice %2 {offsets = [5, 0, 0], sizes = [1, 64, 32], strides = [1, 1, 1]} : vector<8x64x32xf32> to vector<1x64x32xf32>
    %42 = vector.shape_cast %41 : vector<1x64x32xf32> to vector<64x32xf32>
    %cst_24 = arith.constant dense<0.000000e+00> : vector<1x32xf32>
    %43 = tpu.matmul %40, %42, %cst_24 {dimension_numbers = #tpu.dot_dimension_numbers<[1], [0], [0], [1], [0, 0, 1, 1], [], []>} : vector<1x64xf32>, vector<64x32xf32>, vector<1x32xf32> -> vector<1x32xf32>
    %44 = arith.addf %39, %43 : vector<1x32xf32>
    %45 = vector.extract_strided_slice %11 {offsets = [6, 0], sizes = [1, 64], strides = [1, 1]} : vector<8x64xf32> to vector<1x64xf32>
    %46 = vector.extract_strided_slice %2 {offsets = [6, 0, 0], sizes = [1, 64, 32], strides = [1, 1, 1]} : vector<8x64x32xf32> to vector<1x64x32xf32>
    %47 = vector.shape_cast %46 : vector<1x64x32xf32> to vector<64x32xf32>
    %cst_25 = arith.constant dense<0.000000e+00> : vector<1x32xf32>
    %48 = tpu.matmul %45, %47, %cst_25 {dimension_numbers = #tpu.dot_dimension_numbers<[1], [0], [0], [1], [0, 0, 1, 1], [], []>} : vector<1x64xf32>, vector<64x32xf32>, vector<1x32xf32> -> vector<1x32xf32>
    %49 = arith.addf %44, %48 : vector<1x32xf32>
    %50 = vector.extract_strided_slice %11 {offsets = [7, 0], sizes = [1, 64], strides = [1, 1]} : vector<8x64xf32> to vector<1x64xf32>
    %51 = vector.extract_strided_slice %2 {offsets = [7, 0, 0], sizes = [1, 64, 32], strides = [1, 1, 1]} : vector<8x64x32xf32> to vector<1x64x32xf32>
    %52 = vector.shape_cast %51 : vector<1x64x32xf32> to vector<64x32xf32>
    %cst_26 = arith.constant dense<0.000000e+00> : vector<1x32xf32>
    %53 = tpu.matmul %50, %52, %cst_26 {dimension_numbers = #tpu.dot_dimension_numbers<[1], [0], [0], [1], [0, 0, 1, 1], [], []>} : vector<1x64xf32>, vector<64x32xf32>, vector<1x32xf32> -> vector<1x32xf32>
    %54 = arith.addf %49, %53 : vector<1x32xf32>
    %55 = arith.mulf %54, %54 : vector<1x32xf32>
    %cst_27 = arith.constant dense<0.000000e+00> : vector<1xf32>
    %56 = vector.multi_reduction <add>, %55, %cst_27 [1] : vector<1x32xf32> to vector<1xf32>
    %57 = vector.shape_cast %56 : vector<1xf32> to vector<1x1xf32>
    %58 = math.sqrt %57 : vector<1x1xf32>
    %cst_28 = arith.constant 1.000000e-07 : f32
    %59 = vector.broadcast %cst_28 : f32 to vector<1x1xf32>
    %60 = arith.addf %58, %59 : vector<1x1xf32>
    %61 = tpu.reciprocal %60 {approx = true} : vector<1x1xf32> -> vector<1x1xf32>
    %62 = vector.broadcast %61 : vector<1x1xf32> to vector<1x32xf32>
    %63 = arith.mulf %54, %62 : vector<1x32xf32>
    %64 = vector.broadcast %5 : vector<1x1xf32> to vector<1x32xf32>
    %65 = arith.mulf %64, %63 : vector<1x32xf32>
    %c0_29 = arith.constant 0 : index
    %c1 = arith.constant 1 : index
    %c0_30 = arith.constant 0 : index
    %c0_31 = arith.constant 0 : index
    %66 = vector.load %arg2[%c0_29, %c1, %c0_30, %c0_31] : memref<1x4x32x64xf32, #tpu.memory_space<vmem>>, vector<1x1x32x64xf32>
    %67 = vector.shape_cast %66 : vector<1x1x32x64xf32> to vector<32x64xf32>
    %cst_32 = arith.constant dense<0.000000e+00> : vector<8x64xf32>
    %68 = tpu.matmul %0, %67, %cst_32 {dimension_numbers = #tpu.dot_dimension_numbers<[1], [0], [0], [1], [0, 0, 1, 1], [], []>} : vector<8x32xf32>, vector<32x64xf32>, vector<8x64xf32> -> vector<8x64xf32>
    %69 = arith.addf %68, %1 : vector<8x64xf32>
    %cst_33 = arith.constant 0.000000e+00 : f32
    %70 = vector.broadcast %cst_33 : f32 to vector<8x64xf32>
    %71 = arith.maximumf %69, %70 : vector<8x64xf32>
    %c0_34 = arith.constant 0 : index
    %c1_35 = arith.constant 1 : index
    %c0_36 = arith.constant 0 : index
    %c0_37 = arith.constant 0 : index
    %72 = vector.load %arg7[%c0_34, %c1_35, %c0_36, %c0_37] : memref<1x4x8x64xf32, #tpu.memory_space<vmem>>, vector<1x1x8x64xf32>
    %73 = vector.shape_cast %72 : vector<1x1x8x64xf32> to vector<8x64xf32>
    %74 = vector.shape_cast %71 : vector<8x64xf32> to vector<1x1x8x64xf32>
    tpu.vector_store %arg7[%c0_34, %c1_35, %c0_36, %c0_37], %74 {strides = array<i32>} : memref<1x4x8x64xf32, #tpu.memory_space<vmem>>, vector<1x1x8x64xf32>,
    %75 = vector.extract_strided_slice %71 {offsets = [0, 0], sizes = [1, 64], strides = [1, 1]} : vector<8x64xf32> to vector<1x64xf32>
    %76 = vector.extract_strided_slice %2 {offsets = [0, 0, 0], sizes = [1, 64, 32], strides = [1, 1, 1]} : vector<8x64x32xf32> to vector<1x64x32xf32>
    %77 = vector.shape_cast %76 : vector<1x64x32xf32> to vector<64x32xf32>
    %cst_38 = arith.constant dense<0.000000e+00> : vector<1x32xf32>
    %78 = tpu.matmul %75, %77, %cst_38 {dimension_numbers = #tpu.dot_dimension_numbers<[1], [0], [0], [1], [0, 0, 1, 1], [], []>} : vector<1x64xf32>, vector<64x32xf32>, vector<1x32xf32> -> vector<1x32xf32>
    %79 = arith.addf %3, %78 : vector<1x32xf32>
    %80 = vector.extract_strided_slice %71 {offsets = [1, 0], sizes = [1, 64], strides = [1, 1]} : vector<8x64xf32> to vector<1x64xf32>
    %81 = vector.extract_strided_slice %2 {offsets = [1, 0, 0], sizes = [1, 64, 32], strides = [1, 1, 1]} : vector<8x64x32xf32> to vector<1x64x32xf32>
    %82 = vector.shape_cast %81 : vector<1x64x32xf32> to vector<64x32xf32>
    %cst_39 = arith.constant dense<0.000000e+00> : vector<1x32xf32>
    %83 = tpu.matmul %80, %82, %cst_39 {dimension_numbers = #tpu.dot_dimension_numbers<[1], [0], [0], [1], [0, 0, 1, 1], [], []>} : vector<1x64xf32>, vector<64x32xf32>, vector<1x32xf32> -> vector<1x32xf32>
    %84 = arith.addf %79, %83 : vector<1x32xf32>
    %85 = vector.extract_strided_slice %71 {offsets = [2, 0], sizes = [1, 64], strides = [1, 1]} : vector<8x64xf32> to vector<1x64xf32>
    %86 = vector.extract_strided_slice %2 {offsets = [2, 0, 0], sizes = [1, 64, 32], strides = [1, 1, 1]} : vector<8x64x32xf32> to vector<1x64x32xf32>
    %87 = vector.shape_cast %86 : vector<1x64x32xf32> to vector<64x32xf32>
    %cst_40 = arith.constant dense<0.000000e+00> : vector<1x32xf32>
    %88 = tpu.matmul %85, %87, %cst_40 {dimension_numbers = #tpu.dot_dimension_numbers<[1], [0], [0], [1], [0, 0, 1, 1], [], []>} : vector<1x64xf32>, vector<64x32xf32>, vector<1x32xf32> -> vector<1x32xf32>
    %89 = arith.addf %84, %88 : vector<1x32xf32>
    %90 = vector.extract_strided_slice %71 {offsets = [3, 0], sizes = [1, 64], strides = [1, 1]} : vector<8x64xf32> to vector<1x64xf32>
    %91 = vector.extract_strided_slice %2 {offsets = [3, 0, 0], sizes = [1, 64, 32], strides = [1, 1, 1]} : vector<8x64x32xf32> to vector<1x64x32xf32>
    %92 = vector.shape_cast %91 : vector<1x64x32xf32> to vector<64x32xf32>
    %cst_41 = arith.constant dense<0.000000e+00> : vector<1x32xf32>
    %93 = tpu.matmul %90, %92, %cst_41 {dimension_numbers = #tpu.dot_dimension_numbers<[1], [0], [0], [1], [0, 0, 1, 1], [], []>} : vector<1x64xf32>, vector<64x32xf32>, vector<1x32xf32> -> vector<1x32xf32>
    %94 = arith.addf %89, %93 : vector<1x32xf32>
    %95 = vector.extract_strided_slice %71 {offsets = [4, 0], sizes = [1, 64], strides = [1, 1]} : vector<8x64xf32> to vector<1x64xf32>
    %96 = vector.extract_strided_slice %2 {offsets = [4, 0, 0], sizes = [1, 64, 32], strides = [1, 1, 1]} : vector<8x64x32xf32> to vector<1x64x32xf32>
    %97 = vector.shape_cast %96 : vector<1x64x32xf32> to vector<64x32xf32>
    %cst_42 = arith.constant dense<0.000000e+00> : vector<1x32xf32>
    %98 = tpu.matmul %95, %97, %cst_42 {dimension_numbers = #tpu.dot_dimension_numbers<[1], [0], [0], [1], [0, 0, 1, 1], [], []>} : vector<1x64xf32>, vector<64x32xf32>, vector<1x32xf32> -> vector<1x32xf32>
    %99 = arith.addf %94, %98 : vector<1x32xf32>
    %100 = vector.extract_strided_slice %71 {offsets = [5, 0], sizes = [1, 64], strides = [1, 1]} : vector<8x64xf32> to vector<1x64xf32>
    %101 = vector.extract_strided_slice %2 {offsets = [5, 0, 0], sizes = [1, 64, 32], strides = [1, 1, 1]} : vector<8x64x32xf32> to vector<1x64x32xf32>
    %102 = vector.shape_cast %101 : vector<1x64x32xf32> to vector<64x32xf32>
    %cst_43 = arith.constant dense<0.000000e+00> : vector<1x32xf32>
    %103 = tpu.matmul %100, %102, %cst_43 {dimension_numbers = #tpu.dot_dimension_numbers<[1], [0], [0], [1], [0, 0, 1, 1], [], []>} : vector<1x64xf32>, vector<64x32xf32>, vector<1x32xf32> -> vector<1x32xf32>
    %104 = arith.addf %99, %103 : vector<1x32xf32>
    %105 = vector.extract_strided_slice %71 {offsets = [6, 0], sizes = [1, 64], strides = [1, 1]} : vector<8x64xf32> to vector<1x64xf32>
    %106 = vector.extract_strided_slice %2 {offsets = [6, 0, 0], sizes = [1, 64, 32], strides = [1, 1, 1]} : vector<8x64x32xf32> to vector<1x64x32xf32>
    %107 = vector.shape_cast %106 : vector<1x64x32xf32> to vector<64x32xf32>
    %cst_44 = arith.constant dense<0.000000e+00> : vector<1x32xf32>
    %108 = tpu.matmul %105, %107, %cst_44 {dimension_numbers = #tpu.dot_dimension_numbers<[1], [0], [0], [1], [0, 0, 1, 1], [], []>} : vector<1x64xf32>, vector<64x32xf32>, vector<1x32xf32> -> vector<1x32xf32>
    %109 = arith.addf %104, %108 : vector<1x32xf32>
    %110 = vector.extract_strided_slice %71 {offsets = [7, 0], sizes = [1, 64], strides = [1, 1]} : vector<8x64xf32> to vector<1x64xf32>
    %111 = vector.extract_strided_slice %2 {offsets = [7, 0, 0], sizes = [1, 64, 32], strides = [1, 1, 1]} : vector<8x64x32xf32> to vector<1x64x32xf32>
    %112 = vector.shape_cast %111 : vector<1x64x32xf32> to vector<64x32xf32>
    %cst_45 = arith.constant dense<0.000000e+00> : vector<1x32xf32>
    %113 = tpu.matmul %110, %112, %cst_45 {dimension_numbers = #tpu.dot_dimension_numbers<[1], [0], [0], [1], [0, 0, 1, 1], [], []>} : vector<1x64xf32>, vector<64x32xf32>, vector<1x32xf32> -> vector<1x32xf32>
    %114 = arith.addf %109, %113 : vector<1x32xf32>
    %115 = arith.mulf %114, %114 : vector<1x32xf32>
    %cst_46 = arith.constant dense<0.000000e+00> : vector<1xf32>
    %116 = vector.multi_reduction <add>, %115, %cst_46 [1] : vector<1x32xf32> to vector<1xf32>
    %117 = vector.shape_cast %116 : vector<1xf32> to vector<1x1xf32>
    %118 = math.sqrt %117 : vector<1x1xf32>
    %cst_47 = arith.constant 1.000000e-07 : f32
    %119 = vector.broadcast %cst_47 : f32 to vector<1x1xf32>
    %120 = arith.addf %118, %119 : vector<1x1xf32>
    %121 = tpu.reciprocal %120 {approx = true} : vector<1x1xf32> -> vector<1x1xf32>
    %122 = vector.broadcast %121 : vector<1x1xf32> to vector<1x32xf32>
    %123 = arith.mulf %114, %122 : vector<1x32xf32>
    %124 = vector.broadcast %5 : vector<1x1xf32> to vector<1x32xf32>
    %125 = arith.mulf %124, %123 : vector<1x32xf32>
    %c0_48 = arith.constant 0 : index
    %c2 = arith.constant 2 : index
    %c0_49 = arith.constant 0 : index
    %c0_50 = arith.constant 0 : index
    %126 = vector.load %arg2[%c0_48, %c2, %c0_49, %c0_50] : memref<1x4x32x64xf32, #tpu.memory_space<vmem>>, vector<1x1x32x64xf32>
    %127 = vector.shape_cast %126 : vector<1x1x32x64xf32> to vector<32x64xf32>
    %cst_51 = arith.constant dense<0.000000e+00> : vector<8x64xf32>
    %128 = tpu.matmul %0, %127, %cst_51 {dimension_numbers = #tpu.dot_dimension_numbers<[1], [0], [0], [1], [0, 0, 1, 1], [], []>} : vector<8x32xf32>, vector<32x64xf32>, vector<8x64xf32> -> vector<8x64xf32>
    %129 = arith.addf %128, %1 : vector<8x64xf32>
    %cst_52 = arith.constant 0.000000e+00 : f32
    %130 = vector.broadcast %cst_52 : f32 to vector<8x64xf32>
    %131 = arith.maximumf %129, %130 : vector<8x64xf32>
    %c0_53 = arith.constant 0 : index
    %c2_54 = arith.constant 2 : index
    %c0_55 = arith.constant 0 : index
    %c0_56 = arith.constant 0 : index
    %132 = vector.load %arg7[%c0_53, %c2_54, %c0_55, %c0_56] : memref<1x4x8x64xf32, #tpu.memory_space<vmem>>, vector<1x1x8x64xf32>
    %133 = vector.shape_cast %132 : vector<1x1x8x64xf32> to vector<8x64xf32>
    %134 = vector.shape_cast %131 : vector<8x64xf32> to vector<1x1x8x64xf32>
    tpu.vector_store %arg7[%c0_53, %c2_54, %c0_55, %c0_56], %134 {strides = array<i32>} : memref<1x4x8x64xf32, #tpu.memory_space<vmem>>, vector<1x1x8x64xf32>,
    %135 = vector.extract_strided_slice %131 {offsets = [0, 0], sizes = [1, 64], strides = [1, 1]} : vector<8x64xf32> to vector<1x64xf32>
    %136 = vector.extract_strided_slice %2 {offsets = [0, 0, 0], sizes = [1, 64, 32], strides = [1, 1, 1]} : vector<8x64x32xf32> to vector<1x64x32xf32>
    %137 = vector.shape_cast %136 : vector<1x64x32xf32> to vector<64x32xf32>
    %cst_57 = arith.constant dense<0.000000e+00> : vector<1x32xf32>
    %138 = tpu.matmul %135, %137, %cst_57 {dimension_numbers = #tpu.dot_dimension_numbers<[1], [0], [0], [1], [0, 0, 1, 1], [], []>} : vector<1x64xf32>, vector<64x32xf32>, vector<1x32xf32> -> vector<1x32xf32>
    %139 = arith.addf %3, %138 : vector<1x32xf32>
    %140 = vector.extract_strided_slice %131 {offsets = [1, 0], sizes = [1, 64], strides = [1, 1]} : vector<8x64xf32> to vector<1x64xf32>
    %141 = vector.extract_strided_slice %2 {offsets = [1, 0, 0], sizes = [1, 64, 32], strides = [1, 1, 1]} : vector<8x64x32xf32> to vector<1x64x32xf32>
    %142 = vector.shape_cast %141 : vector<1x64x32xf32> to vector<64x32xf32>
    %cst_58 = arith.constant dense<0.000000e+00> : vector<1x32xf32>
    %143 = tpu.matmul %140, %142, %cst_58 {dimension_numbers = #tpu.dot_dimension_numbers<[1], [0], [0], [1], [0, 0, 1, 1], [], []>} : vector<1x64xf32>, vector<64x32xf32>, vector<1x32xf32> -> vector<1x32xf32>
    %144 = arith.addf %139, %143 : vector<1x32xf32>
    %145 = vector.extract_strided_slice %131 {offsets = [2, 0], sizes = [1, 64], strides = [1, 1]} : vector<8x64xf32> to vector<1x64xf32>
    %146 = vector.extract_strided_slice %2 {offsets = [2, 0, 0], sizes = [1, 64, 32], strides = [1, 1, 1]} : vector<8x64x32xf32> to vector<1x64x32xf32>
    %147 = vector.shape_cast %146 : vector<1x64x32xf32> to vector<64x32xf32>
    %cst_59 = arith.constant dense<0.000000e+00> : vector<1x32xf32>
    %148 = tpu.matmul %145, %147, %cst_59 {dimension_numbers = #tpu.dot_dimension_numbers<[1], [0], [0], [1], [0, 0, 1, 1], [], []>} : vector<1x64xf32>, vector<64x32xf32>, vector<1x32xf32> -> vector<1x32xf32>
    %149 = arith.addf %144, %148 : vector<1x32xf32>
    %150 = vector.extract_strided_slice %131 {offsets = [3, 0], sizes = [1, 64], strides = [1, 1]} : vector<8x64xf32> to vector<1x64xf32>
    %151 = vector.extract_strided_slice %2 {offsets = [3, 0, 0], sizes = [1, 64, 32], strides = [1, 1, 1]} : vector<8x64x32xf32> to vector<1x64x32xf32>
    %152 = vector.shape_cast %151 : vector<1x64x32xf32> to vector<64x32xf32>
    %cst_60 = arith.constant dense<0.000000e+00> : vector<1x32xf32>
    %153 = tpu.matmul %150, %152, %cst_60 {dimension_numbers = #tpu.dot_dimension_numbers<[1], [0], [0], [1], [0, 0, 1, 1], [], []>} : vector<1x64xf32>, vector<64x32xf32>, vector<1x32xf32> -> vector<1x32xf32>
    %154 = arith.addf %149, %153 : vector<1x32xf32>
    %155 = vector.extract_strided_slice %131 {offsets = [4, 0], sizes = [1, 64], strides = [1, 1]} : vector<8x64xf32> to vector<1x64xf32>
    %156 = vector.extract_strided_slice %2 {offsets = [4, 0, 0], sizes = [1, 64, 32], strides = [1, 1, 1]} : vector<8x64x32xf32> to vector<1x64x32xf32>
    %157 = vector.shape_cast %156 : vector<1x64x32xf32> to vector<64x32xf32>
    %cst_61 = arith.constant dense<0.000000e+00> : vector<1x32xf32>
    %158 = tpu.matmul %155, %157, %cst_61 {dimension_numbers = #tpu.dot_dimension_numbers<[1], [0], [0], [1], [0, 0, 1, 1], [], []>} : vector<1x64xf32>, vector<64x32xf32>, vector<1x32xf32> -> vector<1x32xf32>
    %159 = arith.addf %154, %158 : vector<1x32xf32>
    %160 = vector.extract_strided_slice %131 {offsets = [5, 0], sizes = [1, 64], strides = [1, 1]} : vector<8x64xf32> to vector<1x64xf32>
    %161 = vector.extract_strided_slice %2 {offsets = [5, 0, 0], sizes = [1, 64, 32], strides = [1, 1, 1]} : vector<8x64x32xf32> to vector<1x64x32xf32>
    %162 = vector.shape_cast %161 : vector<1x64x32xf32> to vector<64x32xf32>
    %cst_62 = arith.constant dense<0.000000e+00> : vector<1x32xf32>
    %163 = tpu.matmul %160, %162, %cst_62 {dimension_numbers = #tpu.dot_dimension_numbers<[1], [0], [0], [1], [0, 0, 1, 1], [], []>} : vector<1x64xf32>, vector<64x32xf32>, vector<1x32xf32> -> vector<1x32xf32>
    %164 = arith.addf %159, %163 : vector<1x32xf32>
    %165 = vector.extract_strided_slice %131 {offsets = [6, 0], sizes = [1, 64], strides = [1, 1]} : vector<8x64xf32> to vector<1x64xf32>
    %166 = vector.extract_strided_slice %2 {offsets = [6, 0, 0], sizes = [1, 64, 32], strides = [1, 1, 1]} : vector<8x64x32xf32> to vector<1x64x32xf32>
    %167 = vector.shape_cast %166 : vector<1x64x32xf32> to vector<64x32xf32>
    %cst_63 = arith.constant dense<0.000000e+00> : vector<1x32xf32>
    %168 = tpu.matmul %165, %167, %cst_63 {dimension_numbers = #tpu.dot_dimension_numbers<[1], [0], [0], [1], [0, 0, 1, 1], [], []>} : vector<1x64xf32>, vector<64x32xf32>, vector<1x32xf32> -> vector<1x32xf32>
    %169 = arith.addf %164, %168 : vector<1x32xf32>
    %170 = vector.extract_strided_slice %131 {offsets = [7, 0], sizes = [1, 64], strides = [1, 1]} : vector<8x64xf32> to vector<1x64xf32>
    %171 = vector.extract_strided_slice %2 {offsets = [7, 0, 0], sizes = [1, 64, 32], strides = [1, 1, 1]} : vector<8x64x32xf32> to vector<1x64x32xf32>
    %172 = vector.shape_cast %171 : vector<1x64x32xf32> to vector<64x32xf32>
    %cst_64 = arith.constant dense<0.000000e+00> : vector<1x32xf32>
    %173 = tpu.matmul %170, %172, %cst_64 {dimension_numbers = #tpu.dot_dimension_numbers<[1], [0], [0], [1], [0, 0, 1, 1], [], []>} : vector<1x64xf32>, vector<64x32xf32>, vector<1x32xf32> -> vector<1x32xf32>
    %174 = arith.addf %169, %173 : vector<1x32xf32>
    %175 = arith.mulf %174, %174 : vector<1x32xf32>
    %cst_65 = arith.constant dense<0.000000e+00> : vector<1xf32>
    %176 = vector.multi_reduction <add>, %175, %cst_65 [1] : vector<1x32xf32> to vector<1xf32>
    %177 = vector.shape_cast %176 : vector<1xf32> to vector<1x1xf32>
    %178 = math.sqrt %177 : vector<1x1xf32>
    %cst_66 = arith.constant 1.000000e-07 : f32
    %179 = vector.broadcast %cst_66 : f32 to vector<1x1xf32>
    %180 = arith.addf %178, %179 : vector<1x1xf32>
    %181 = tpu.reciprocal %180 {approx = true} : vector<1x1xf32> -> vector<1x1xf32>
    %182 = vector.broadcast %181 : vector<1x1xf32> to vector<1x32xf32>
    %183 = arith.mulf %174, %182 : vector<1x32xf32>
    %184 = vector.broadcast %5 : vector<1x1xf32> to vector<1x32xf32>
    %185 = arith.mulf %184, %183 : vector<1x32xf32>
    %c0_67 = arith.constant 0 : index
    %c3 = arith.constant 3 : index
    %c0_68 = arith.constant 0 : index
    %c0_69 = arith.constant 0 : index
    %186 = vector.load %arg2[%c0_67, %c3, %c0_68, %c0_69] : memref<1x4x32x64xf32, #tpu.memory_space<vmem>>, vector<1x1x32x64xf32>
    %187 = vector.shape_cast %186 : vector<1x1x32x64xf32> to vector<32x64xf32>
    %cst_70 = arith.constant dense<0.000000e+00> : vector<8x64xf32>
    %188 = tpu.matmul %0, %187, %cst_70 {dimension_numbers = #tpu.dot_dimension_numbers<[1], [0], [0], [1], [0, 0, 1, 1], [], []>} : vector<8x32xf32>, vector<32x64xf32>, vector<8x64xf32> -> vector<8x64xf32>
    %189 = arith.addf %188, %1 : vector<8x64xf32>
    %cst_71 = arith.constant 0.000000e+00 : f32
    %190 = vector.broadcast %cst_71 : f32 to vector<8x64xf32>
    %191 = arith.maximumf %189, %190 : vector<8x64xf32>
    %c0_72 = arith.constant 0 : index
    %c3_73 = arith.constant 3 : index
    %c0_74 = arith.constant 0 : index
    %c0_75 = arith.constant 0 : index
    %192 = vector.load %arg7[%c0_72, %c3_73, %c0_74, %c0_75] : memref<1x4x8x64xf32, #tpu.memory_space<vmem>>, vector<1x1x8x64xf32>
    %193 = vector.shape_cast %192 : vector<1x1x8x64xf32> to vector<8x64xf32>
    %194 = vector.shape_cast %191 : vector<8x64xf32> to vector<1x1x8x64xf32>
    tpu.vector_store %arg7[%c0_72, %c3_73, %c0_74, %c0_75], %194 {strides = array<i32>} : memref<1x4x8x64xf32, #tpu.memory_space<vmem>>, vector<1x1x8x64xf32>,
    %195 = vector.extract_strided_slice %191 {offsets = [0, 0], sizes = [1, 64], strides = [1, 1]} : vector<8x64xf32> to vector<1x64xf32>
    %196 = vector.extract_strided_slice %2 {offsets = [0, 0, 0], sizes = [1, 64, 32], strides = [1, 1, 1]} : vector<8x64x32xf32> to vector<1x64x32xf32>
    %197 = vector.shape_cast %196 : vector<1x64x32xf32> to vector<64x32xf32>
    %cst_76 = arith.constant dense<0.000000e+00> : vector<1x32xf32>
    %198 = tpu.matmul %195, %197, %cst_76 {dimension_numbers = #tpu.dot_dimension_numbers<[1], [0], [0], [1], [0, 0, 1, 1], [], []>} : vector<1x64xf32>, vector<64x32xf32>, vector<1x32xf32> -> vector<1x32xf32>
    %199 = arith.addf %3, %198 : vector<1x32xf32>
    %200 = vector.extract_strided_slice %191 {offsets = [1, 0], sizes = [1, 64], strides = [1, 1]} : vector<8x64xf32> to vector<1x64xf32>
    %201 = vector.extract_strided_slice %2 {offsets = [1, 0, 0], sizes = [1, 64, 32], strides = [1, 1, 1]} : vector<8x64x32xf32> to vector<1x64x32xf32>
    %202 = vector.shape_cast %201 : vector<1x64x32xf32> to vector<64x32xf32>
    %cst_77 = arith.constant dense<0.000000e+00> : vector<1x32xf32>
    %203 = tpu.matmul %200, %202, %cst_77 {dimension_numbers = #tpu.dot_dimension_numbers<[1], [0], [0], [1], [0, 0, 1, 1], [], []>} : vector<1x64xf32>, vector<64x32xf32>, vector<1x32xf32> -> vector<1x32xf32>
    %204 = arith.addf %199, %203 : vector<1x32xf32>
    %205 = vector.extract_strided_slice %191 {offsets = [2, 0], sizes = [1, 64], strides = [1, 1]} : vector<8x64xf32> to vector<1x64xf32>
    %206 = vector.extract_strided_slice %2 {offsets = [2, 0, 0], sizes = [1, 64, 32], strides = [1, 1, 1]} : vector<8x64x32xf32> to vector<1x64x32xf32>
    %207 = vector.shape_cast %206 : vector<1x64x32xf32> to vector<64x32xf32>
    %cst_78 = arith.constant dense<0.000000e+00> : vector<1x32xf32>
    %208 = tpu.matmul %205, %207, %cst_78 {dimension_numbers = #tpu.dot_dimension_numbers<[1], [0], [0], [1], [0, 0, 1, 1], [], []>} : vector<1x64xf32>, vector<64x32xf32>, vector<1x32xf32> -> vector<1x32xf32>
    %209 = arith.addf %204, %208 : vector<1x32xf32>
    %210 = vector.extract_strided_slice %191 {offsets = [3, 0], sizes = [1, 64], strides = [1, 1]} : vector<8x64xf32> to vector<1x64xf32>
    %211 = vector.extract_strided_slice %2 {offsets = [3, 0, 0], sizes = [1, 64, 32], strides = [1, 1, 1]} : vector<8x64x32xf32> to vector<1x64x32xf32>
    %212 = vector.shape_cast %211 : vector<1x64x32xf32> to vector<64x32xf32>
    %cst_79 = arith.constant dense<0.000000e+00> : vector<1x32xf32>
    %213 = tpu.matmul %210, %212, %cst_79 {dimension_numbers = #tpu.dot_dimension_numbers<[1], [0], [0], [1], [0, 0, 1, 1], [], []>} : vector<1x64xf32>, vector<64x32xf32>, vector<1x32xf32> -> vector<1x32xf32>
    %214 = arith.addf %209, %213 : vector<1x32xf32>
    %215 = vector.extract_strided_slice %191 {offsets = [4, 0], sizes = [1, 64], strides = [1, 1]} : vector<8x64xf32> to vector<1x64xf32>
    %216 = vector.extract_strided_slice %2 {offsets = [4, 0, 0], sizes = [1, 64, 32], strides = [1, 1, 1]} : vector<8x64x32xf32> to vector<1x64x32xf32>
    %217 = vector.shape_cast %216 : vector<1x64x32xf32> to vector<64x32xf32>
    %cst_80 = arith.constant dense<0.000000e+00> : vector<1x32xf32>
    %218 = tpu.matmul %215, %217, %cst_80 {dimension_numbers = #tpu.dot_dimension_numbers<[1], [0], [0], [1], [0, 0, 1, 1], [], []>} : vector<1x64xf32>, vector<64x32xf32>, vector<1x32xf32> -> vector<1x32xf32>
    %219 = arith.addf %214, %218 : vector<1x32xf32>
    %220 = vector.extract_strided_slice %191 {offsets = [5, 0], sizes = [1, 64], strides = [1, 1]} : vector<8x64xf32> to vector<1x64xf32>
    %221 = vector.extract_strided_slice %2 {offsets = [5, 0, 0], sizes = [1, 64, 32], strides = [1, 1, 1]} : vector<8x64x32xf32> to vector<1x64x32xf32>
    %222 = vector.shape_cast %221 : vector<1x64x32xf32> to vector<64x32xf32>
    %cst_81 = arith.constant dense<0.000000e+00> : vector<1x32xf32>
    %223 = tpu.matmul %220, %222, %cst_81 {dimension_numbers = #tpu.dot_dimension_numbers<[1], [0], [0], [1], [0, 0, 1, 1], [], []>} : vector<1x64xf32>, vector<64x32xf32>, vector<1x32xf32> -> vector<1x32xf32>
    %224 = arith.addf %219, %223 : vector<1x32xf32>
    %225 = vector.extract_strided_slice %191 {offsets = [6, 0], sizes = [1, 64], strides = [1, 1]} : vector<8x64xf32> to vector<1x64xf32>
    %226 = vector.extract_strided_slice %2 {offsets = [6, 0, 0], sizes = [1, 64, 32], strides = [1, 1, 1]} : vector<8x64x32xf32> to vector<1x64x32xf32>
    %227 = vector.shape_cast %226 : vector<1x64x32xf32> to vector<64x32xf32>
    %cst_82 = arith.constant dense<0.000000e+00> : vector<1x32xf32>
    %228 = tpu.matmul %225, %227, %cst_82 {dimension_numbers = #tpu.dot_dimension_numbers<[1], [0], [0], [1], [0, 0, 1, 1], [], []>} : vector<1x64xf32>, vector<64x32xf32>, vector<1x32xf32> -> vector<1x32xf32>
    %229 = arith.addf %224, %228 : vector<1x32xf32>
    %230 = vector.extract_strided_slice %191 {offsets = [7, 0], sizes = [1, 64], strides = [1, 1]} : vector<8x64xf32> to vector<1x64xf32>
    %231 = vector.extract_strided_slice %2 {offsets = [7, 0, 0], sizes = [1, 64, 32], strides = [1, 1, 1]} : vector<8x64x32xf32> to vector<1x64x32xf32>
    %232 = vector.shape_cast %231 : vector<1x64x32xf32> to vector<64x32xf32>
    %cst_83 = arith.constant dense<0.000000e+00> : vector<1x32xf32>
    %233 = tpu.matmul %230, %232, %cst_83 {dimension_numbers = #tpu.dot_dimension_numbers<[1], [0], [0], [1], [0, 0, 1, 1], [], []>} : vector<1x64xf32>, vector<64x32xf32>, vector<1x32xf32> -> vector<1x32xf32>
    %234 = arith.addf %229, %233 : vector<1x32xf32>
    %235 = arith.mulf %234, %234 : vector<1x32xf32>
    %cst_84 = arith.constant dense<0.000000e+00> : vector<1xf32>
    %236 = vector.multi_reduction <add>, %235, %cst_84 [1] : vector<1x32xf32> to vector<1xf32>
    %237 = vector.shape_cast %236 : vector<1xf32> to vector<1x1xf32>
    %238 = math.sqrt %237 : vector<1x1xf32>
    %cst_85 = arith.constant 1.000000e-07 : f32
    %239 = vector.broadcast %cst_85 : f32 to vector<1x1xf32>
    %240 = arith.addf %238, %239 : vector<1x1xf32>
    %241 = tpu.reciprocal %240 {approx = true} : vector<1x1xf32> -> vector<1x1xf32>
    %242 = vector.broadcast %241 : vector<1x1xf32> to vector<1x32xf32>
    %243 = arith.mulf %234, %242 : vector<1x32xf32>
    %244 = vector.broadcast %5 : vector<1x1xf32> to vector<1x32xf32>
    %245 = arith.mulf %244, %243 : vector<1x32xf32>
    %246 = tpu.concatenate %65, %125, %185, %245 in 0 : vector<1x32xf32>, vector<1x32xf32>, vector<1x32xf32>, vector<1x32xf32> -> vector<4x32xf32>
    %c0_86 = arith.constant 0 : index
    %c0_87 = arith.constant 0 : index
    %c0_88 = arith.constant 0 : index
    %247 = vector.load %arg8[%c0_86, %c0_87, %c0_88] : memref<1x4x32xf32, #tpu.memory_space<vmem>>, vector<1x4x32xf32>
    %248 = vector.shape_cast %247 : vector<1x4x32xf32> to vector<4x32xf32>
    %249 = vector.shape_cast %246 : vector<4x32xf32> to vector<1x4x32xf32>
    tpu.vector_store %arg8[%c0_86, %c0_87, %c0_88], %249 {strides = array<i32>} : memref<1x4x32xf32, #tpu.memory_space<vmem>>, vector<1x4x32xf32>,
    return
  }
  func.func @transform_0(%arg0: i32) -> (i32, i32) {
    %c0_i32 = arith.constant 0 : i32
    %c0_i32_0 = arith.constant 0 : i32
    %c0_i32_1 = arith.constant 0 : i32
    return %c0_i32, %c0_i32_0 : i32, i32
  }
  func.func @transform_1(%arg0: i32) -> (i32, i32, i32, i32) {
    %c0_i32 = arith.constant 0 : i32
    %c0_i32_0 = arith.constant 0 : i32
    %c0_i32_1 = arith.constant 0 : i32
    %c0_i32_2 = arith.constant 0 : i32
    return %arg0, %c0_i32, %c0_i32_0, %c0_i32_1 : i32, i32, i32, i32
  }
  func.func @transform_2(%arg0: i32) -> (i32, i32) {
    %c0_i32 = arith.constant 0 : i32
    %c0_i32_0 = arith.constant 0 : i32
    %c0_i32_1 = arith.constant 0 : i32
    return %c0_i32, %c0_i32_0 : i32, i32
  }
  func.func @transform_3(%arg0: i32) -> (i32, i32) {
    %c0_i32 = arith.constant 0 : i32
    %c0_i32_0 = arith.constant 0 : i32
    %c0_i32_1 = arith.constant 0 : i32
    return %c0_i32, %c0_i32_0 : i32, i32
  }
  func.func @transform_4(%arg0: i32) -> (i32, i32, i32) {
    %c0_i32 = arith.constant 0 : i32
    %c0_i32_0 = arith.constant 0 : i32
    %c0_i32_1 = arith.constant 0 : i32
    %c0_i32_2 = arith.constant 0 : i32
    return %c0_i32, %c0_i32_0, %c0_i32_1 : i32, i32, i32
  }
  func.func @transform_5(%arg0: i32) -> (i32, i32) {
    %c0_i32 = arith.constant 0 : i32
    %c0_i32_0 = arith.constant 0 : i32
    %c0_i32_1 = arith.constant 0 : i32
    return %c0_i32, %c0_i32_0 : i32, i32
  }
  func.func @transform_6(%arg0: i32) -> (i32, i32, i32, i32) {
    %c0_i32 = arith.constant 0 : i32
    %c0_i32_0 = arith.constant 0 : i32
    %c0_i32_1 = arith.constant 0 : i32
    %c0_i32_2 = arith.constant 0 : i32
    return %arg0, %c0_i32, %c0_i32_0, %c0_i32_1 : i32, i32, i32, i32
  }
  func.func @transform_7(%arg0: i32) -> (i32, i32, i32) {
    %c0_i32 = arith.constant 0 : i32
    %c0_i32_0 = arith.constant 0 : i32
    %c0_i32_1 = arith.constant 0 : i32
    return %arg0, %c0_i32, %c0_i32_0 : i32, i32, i32
  }
}

</mosaic_0001>

<llo_original>
// kernel: _forward_impl.1
$region0: #{_forward_impl.1}
  #allocation0 [shape = 'u32[]', space=smem, size = 0x4, offset = 0x4, fixed_abs, tag = 'smem constant byte address 0x4 - core index']
  #allocation1 [shape = 'u32[72,128]{1,0:T(1,128)}', space=vmem, size = 0x9000, scoped, tag = 'internal scratch']
  #allocation2 [shape = 'f32[1,1]{1,0:T(1,128)S(1)}', space=vmem, size = 0x200, scoped, tag = 'scoped memory for _forward_impl.1']
  %s0 = inlined_call_operand.<no memory space> [shape: f32[1,1], index: 0, kind: input, shape index: {}]
  %s1 = inlined_call_operand.vmem [shape: f32[2,4,32,64], index: 1, kind: input, shape index: {}]
  %s2 = inlined_call_operand.vmem [shape: f32[8,32], index: 2, kind: input, shape index: {}]
  %s3 = inlined_call_operand.vmem [shape: f32[8,64], index: 3, kind: input, shape index: {}]
  %s4 = inlined_call_operand.vmem [shape: f32[8,64,32], index: 4, kind: input, shape index: {}]
  %s5 = inlined_call_operand.vmem [shape: f32[1,32], index: 5, kind: input, shape index: {}]
  %s6 = inlined_call_operand.vmem [shape: f32[2,4,8,64], index: 6, kind: output, shape index: {0}]
  %s7 = inlined_call_operand.hbm [shape: f32[2,4,32], index: 7, kind: output, shape index: {1}]
  %8 = xla_tuple %s6, %s7
  %s9 = sld [smem:[#allocation0]]
  $region65: #{_forward_impl.1} parent=0
    _
  %s11 = ssub.s32 1, %s9
  %s12 = scalar_select 0, %s11, %s9
  %v13 = vstv %s0
  %14 = vst [vmem:[#allocation2] sm:$0x1] %v13
  $region1: #{_forward_impl.1} parent=0
    #allocation3 [shape = 'u8[4096]{0}', space=vmem, size = 0x1000, scoped, tag = 'output window, operand 1']
    #allocation4 [shape = 's32[2]{0}', space=sflag, size = 0x8, scoped, tag = 'scoped memory for _forward_impl.1']
    %15 = vsyncpa [#allocation4], 0
    %s16 = scalar_lea.sflag [#allocation4], 1
    %17 = vsyncpa %s16, 0
    loop: start=0, step=1, limit=4
    $region2: #{_forward_impl.1} parent=1 // loop_pre_header
      _
    $region3: #{_forward_impl.1} parent=1 // loop_header
      %s19 = sphi 0, %s23
      %p20 = scmp.ge.s32.totalorder %s19, 4
      %s27 = sphi 0, %s27
      %s29 = sphi 0, %s27
      %s30 = sphi 0, %s29
      %s44 = sphi 0, %s30
      %s50 = sphi 0, %s52
      %s53 = sphi 0, %s50
      %s54 = sphi 0, %s53
      %s70 = sphi 0, %s54
      %s74 = sphi 0, %s74
      %s76 = sphi 0, %s74
      %s77 = sphi 0, %s76
      %s91 = sphi 0, %s77
      %s95 = sphi 0, %s95
      %s97 = sphi 0, %s95
      %s98 = sphi 0, %s97
      %s112 = sphi 0, %s98
      %s116 = sphi 0, %s116
      %s118 = sphi 0, %s116
      %s119 = sphi 0, %s118
      %s133 = sphi 0, %s119
      %s137 = sphi 0, %s137
      %s139 = sphi 0, %s137
      %s140 = sphi 0, %s139
      %s154 = sphi 0, %s140
      %s160 = sphi 0, %s162
      %s163 = sphi 0, %s160
      %s164 = sphi 0, %s163
      %s180 = sphi 0, %s164
      %s186 = sphi 0, %s188
      %s189 = sphi 0, %s186
      %s190 = sphi 0, %s189
      %s206 = sphi 0, %s190
    $region4: #{_forward_impl.1} parent=1 // loop_header_branch
      %22 = sbr.rel (%p20) target = $region8
    $region5: #{_forward_impl.1} parent=1 // loop_body
      %s24 = ssub.s32 %s19, 1
      %s25 = ssub.s32 %s19, 2
      %s26 = sadd.s32 %s19, 1
      %s28 = sadd.s32 %s27, 1
      %p31 = scmp.eq.s32.totalorder %s19, 1
      %p32 = scmp.ne.s32.totalorder %s27, %s29
      %p33 = scmp.eq.s32.totalorder %s19, 0
      %p34 = por %p32, %p33
      %p35 = scmp.ne.s32.totalorder %s27, %s29
      %p36 = scmp.eq.s32.totalorder %s24, 1
      %p37 = por %p35, %p36
      %p38 = scmp.ne.s32.totalorder %s29, %s30
      %p39 = scmp.eq.s32.totalorder %s24, 0
      %p40 = por %p38, %p39
      %p41 = scmp.ne.s32.totalorder %s29, %s30
      %p42 = scmp.eq.s32.totalorder %s25, 1
      %p43 = por %p41, %p42
      %p45 = scmp.ne.s32.totalorder %s30, %s44
      %p46 = scmp.eq.s32.totalorder %s25, 0
      %p47 = por %p45, %p46
      %s48 = ssub.s32 %s19, %s26
      %p49 = scmp.eq.s32.totalorder %s48, 0
      %s51 = sadd.s32 %s50, 1
      %s52 = scalar_select %p49, %s50, %s51
      %p55 = pneg %p49
      %p56 = scmp.eq.s32.totalorder %s19, 1
      %p57 = por %p55, %p56
      %p58 = scmp.ne.s32.totalorder %s50, %s53
      %p59 = scmp.eq.s32.totalorder %s19, 0
      %p60 = por %p58, %p59
      %p61 = scmp.ne.s32.totalorder %s50, %s53
      %p62 = scmp.eq.s32.totalorder %s24, 1
      %p63 = por %p61, %p62
      %p64 = scmp.ne.s32.totalorder %s53, %s54
      %p65 = scmp.eq.s32.totalorder %s24, 0
      %p66 = por %p64, %p65
      %p67 = scmp.ne.s32.totalorder %s53, %s54
      %p68 = scmp.eq.s32.totalorder %s25, 1
      %p69 = por %p67, %p68
      %p71 = scmp.ne.s32.totalorder %s54, %s70
      %p72 = scmp.eq.s32.totalorder %s25, 0
      %p73 = por %p71, %p72
      %s75 = sadd.s32 %s74, 1
      %p78 = scmp.eq.s32.totalorder %s19, 1
      %p79 = scmp.ne.s32.totalorder %s74, %s76
      %p80 = scmp.eq.s32.totalorder %s19, 0
      %p81 = por %p79, %p80
      %p82 = scmp.ne.s32.totalorder %s74, %s76
      %p83 = scmp.eq.s32.totalorder %s24, 1
      %p84 = por %p82, %p83
      %p85 = scmp.ne.s32.totalorder %s76, %s77
      %p86 = scmp.eq.s32.totalorder %s24, 0
      %p87 = por %p85, %p86
      %p88 = scmp.ne.s32.totalorder %s76, %s77
      %p89 = scmp.eq.s32.totalorder %s25, 1
      %p90 = por %p88, %p89
      %p92 = scmp.ne.s32.totalorder %s77, %s91
      %p93 = scmp.eq.s32.totalorder %s25, 0
      %p94 = por %p92, %p93
      %s96 = sadd.s32 %s95, 1
      %p99 = scmp.eq.s32.totalorder %s19, 1
      %p100 = scmp.ne.s32.totalorder %s95, %s97
      %p101 = scmp.eq.s32.totalorder %s19, 0
      %p102 = por %p100, %p101
      %p103 = scmp.ne.s32.totalorder %s95, %s97
      %p104 = scmp.eq.s32.totalorder %s24, 1
      %p105 = por %p103, %p104
      %p106 = scmp.ne.s32.totalorder %s97, %s98
      %p107 = scmp.eq.s32.totalorder %s24, 0
      %p108 = por %p106, %p107
      %p109 = scmp.ne.s32.totalorder %s97, %s98
      %p110 = scmp.eq.s32.totalorder %s25, 1
      %p111 = por %p109, %p110
      %p113 = scmp.ne.s32.totalorder %s98, %s112
      %p114 = scmp.eq.s32.totalorder %s25, 0
      %p115 = por %p113, %p114
      %s117 = sadd.s32 %s116, 1
      %p120 = scmp.eq.s32.totalorder %s19, 1
      %p121 = scmp.ne.s32.totalorder %s116, %s118
      %p122 = scmp.eq.s32.totalorder %s19, 0
      %p123 = por %p121, %p122
      %p124 = scmp.ne.s32.totalorder %s116, %s118
      %p125 = scmp.eq.s32.totalorder %s24, 1
      %p126 = por %p124, %p125
      %p127 = scmp.ne.s32.totalorder %s118, %s119
      %p128 = scmp.eq.s32.totalorder %s24, 0
      %p129 = por %p127, %p128
      %p130 = scmp.ne.s32.totalorder %s118, %s119
      %p131 = scmp.eq.s32.totalorder %s25, 1
      %p132 = por %p130, %p131
      %p134 = scmp.ne.s32.totalorder %s119, %s133
      %p135 = scmp.eq.s32.totalorder %s25, 0
      %p136 = por %p134, %p135
      %s138 = sadd.s32 %s137, 1
      %p141 = scmp.eq.s32.totalorder %s19, 1
      %p142 = scmp.ne.s32.totalorder %s137, %s139
      %p143 = scmp.eq.s32.totalorder %s19, 0
      %p144 = por %p142, %p143
      %p145 = scmp.ne.s32.totalorder %s137, %s139
      %p146 = scmp.eq.s32.totalorder %s24, 1
      %p147 = por %p145, %p146
      %p148 = scmp.ne.s32.totalorder %s139, %s140
      %p149 = scmp.eq.s32.totalorder %s24, 0
      %p150 = por %p148, %p149
      %p151 = scmp.ne.s32.totalorder %s139, %s140
      %p152 = scmp.eq.s32.totalorder %s25, 1
      %p153 = por %p151, %p152
      %p155 = scmp.ne.s32.totalorder %s140, %s154
      %p156 = scmp.eq.s32.totalorder %s25, 0
      %p157 = por %p155, %p156
      %s158 = ssub.s32 %s19, %s26
      %p159 = scmp.eq.s32.totalorder %s158, 0
      %s161 = sadd.s32 %s160, 1
      %s162 = scalar_select %p159, %s160, %s161
      %p165 = pneg %p159
      %p166 = scmp.eq.s32.totalorder %s19, 1
      %p167 = por %p165, %p166
      %p168 = scmp.ne.s32.totalorder %s160, %s163
      %p169 = scmp.eq.s32.totalorder %s19, 0
      %p170 = por %p168, %p169
      %p171 = scmp.ne.s32.totalorder %s160, %s163
      %p172 = scmp.eq.s32.totalorder %s24, 1
      %p173 = por %p171, %p172
      %p174 = scmp.ne.s32.totalorder %s163, %s164
      %p175 = scmp.eq.s32.totalorder %s24, 0
      %p176 = por %p174, %p175
      %p177 = scmp.ne.s32.totalorder %s163, %s164
      %p178 = scmp.eq.s32.totalorder %s25, 1
      %p179 = por %p177, %p178
      %p181 = scmp.ne.s32.totalorder %s164, %s180
      %p182 = scmp.eq.s32.totalorder %s25, 0
      %p183 = por %p181, %p182
      %s184 = ssub.s32 %s19, %s26
      %p185 = scmp.eq.s32.totalorder %s184, 0
      %s187 = sadd.s32 %s186, 1
      %s188 = scalar_select %p185, %s186, %s187
      %p191 = pneg %p185
      %p192 = scmp.eq.s32.totalorder %s19, 1
      %p193 = por %p191, %p192
      %p194 = scmp.ne.s32.totalorder %s186, %s189
      %p195 = scmp.eq.s32.totalorder %s19, 0
      %p196 = por %p194, %p195
      %p197 = scmp.ne.s32.totalorder %s186, %s189
      %p198 = scmp.eq.s32.totalorder %s24, 1
      %p199 = por %p197, %p198
      %p200 = scmp.ne.s32.totalorder %s189, %s190
      %p201 = scmp.eq.s32.totalorder %s24, 0
      %p202 = por %p200, %p201
      %p203 = scmp.ne.s32.totalorder %s189, %s190
      %p204 = scmp.eq.s32.totalorder %s25, 1
      %p205 = por %p203, %p204
      %p207 = scmp.ne.s32.totalorder %s190, %s206
      %p208 = scmp.eq.s32.totalorder %s25, 0
      %p209 = por %p207, %p208
      %p210 = scmp.le.s32.totalorder 1, %s19
      %p211 = scmp.lt.s32.totalorder %s19, 3
      %p212 = pnand %p210, %p211
      %p213 = pneg %p212
      // Predicated region
      $region9: #{_forward_impl.1} parent=5 // pred_check
        _
      $region10: #{_forward_impl.1} parent=5 // pred_check_branch
        %215 = sbr.rel (%p212) target = $region12
      $region11: #{_forward_impl.1} parent=5 // pred_region
        %s216 = ssub.s32 %s19, 1
        // Predicated region
        $region13: #{_forward_impl.1} parent=11 // pred_check
          %p217 = pneg %p40
        $region14: #{_forward_impl.1} parent=11 // pred_check_branch
          %219 = sbr.rel (%p217) target = $region16
        $region15: #{_forward_impl.1} parent=11 // pred_region
          _
        $region16: #{_forward_impl.1} parent=11 // pred_fallthru
          _
        // Predicated region
        $region17: #{_forward_impl.1} parent=11 // pred_check
          %p220 = pneg %p87
        $region18: #{_forward_impl.1} parent=11 // pred_check_branch
          %222 = sbr.rel (%p220) target = $region20
        $region19: #{_forward_impl.1} parent=11 // pred_region
          _
        $region20: #{_forward_impl.1} parent=11 // pred_fallthru
          _
        // Predicated region
        $region21: #{_forward_impl.1} parent=11 // pred_check
          %p223 = pneg %p108
        $region22: #{_forward_impl.1} parent=11 // pred_check_branch
          %225 = sbr.rel (%p223) target = $region24
        $region23: #{_forward_impl.1} parent=11 // pred_region
          _
        $region24: #{_forward_impl.1} parent=11 // pred_fallthru
          _
        // Predicated region
        $region25: #{_forward_impl.1} parent=11 // pred_check
          %p226 = pneg %p129
        $region26: #{_forward_impl.1} parent=11 // pred_check_branch
          %228 = sbr.rel (%p226) target = $region28
        $region27: #{_forward_impl.1} parent=11 // pred_region
          _
        $region28: #{_forward_impl.1} parent=11 // pred_fallthru
          _
        // Predicated region
        $region29: #{_forward_impl.1} parent=11 // pred_check
          %p229 = pneg %p150
        $region30: #{_forward_impl.1} parent=11 // pred_check_branch
          %231 = sbr.rel (%p229) target = $region32
        $region31: #{_forward_impl.1} parent=11 // pred_region
          _
        $region32: #{_forward_impl.1} parent=11 // pred_fallthru
          _
      $region12: #{_forward_impl.1} parent=5 // pred_fallthru
        _
      %p232 = scmp.lt.s32.totalorder %s19, 2
      // Predicated region
      $region33: #{_forward_impl.1} parent=5 // pred_check
        %p233 = pneg %p232
      $region34: #{_forward_impl.1} parent=5 // pred_check_branch
        %235 = sbr.rel (%p233) target = $region36
      $region35: #{_forward_impl.1} parent=5 // pred_region
        // Predicated region
        $region37: #{_forward_impl.1} parent=35 // pred_check
          %p236 = pneg %p60
        $region38: #{_forward_impl.1} parent=35 // pred_check_branch
          %238 = sbr.rel (%p236) target = $region40
        $region39: #{_forward_impl.1} parent=35 // pred_region
          %p239 = scmp.lt.s32.totalorder %s19, 1
          %s240 = scalar_select %p239, %s19, 1
          %s241 = smul.addr %s240, 16
          %s242 = smul.addr %s241, 8
          %s243 = scalar_lea.vmem %s1, %s242
        $region40: #{_forward_impl.1} parent=35 // pred_fallthru
          _
      $region36: #{_forward_impl.1} parent=5 // pred_fallthru
        _
      %p244 = scmp.le.s32.totalorder 1, %s19
      %p245 = scmp.lt.s32.totalorder %s19, 3
      %p246 = pnand %p244, %p245
      %p247 = pneg %p246
      // Predicated region
      $region41: #{_forward_impl.1} parent=5 // pred_check
        _
      $region42: #{_forward_impl.1} parent=5 // pred_check_branch
        %249 = sbr.rel (%p246) target = $region44
      $region43: #{_forward_impl.1} parent=5 // pred_region
        %s250 = ssub.s32 %s19, 1
        %p251 = pneg %p40
        %p252 = pneg %p37
        %p253 = scmp.lt.s32.totalorder %s24, 1
        %s254 = scalar_select %p253, %s24, 1
        %s255 = smul.addr %s254, 16
        %s256 = smul.addr %s255, 8
        %s257 = scalar_lea.vmem %s1, %s256
        %p258 = pneg %p66
        %p259 = pneg %p63
        %p260 = pneg %p87
        %p261 = pneg %p84
        %p262 = pneg %p108
        %p263 = pneg %p105
        %p264 = pneg %p129
        %p265 = pneg %p126
        %p266 = pneg %p150
        %p267 = pneg %p147
        %p268 = pneg %p176
        %p269 = pneg %p173
        %p270 = scmp.lt.s32.totalorder %s24, 1
        %s271 = scalar_select %p270, %s24, 1
        %s272 = smul.addr %s271, 4
        %s273 = smul.addr %s272, 8
        %s274 = scalar_lea.vmem %s6, %s273
        %p275 = pneg %p202
        %p276 = pneg %p199
        %s277 = sand.u32 %s189, 1
        %s278 = scalar_lea.sflag [#allocation4], %s277
        %s279 = sand.u32 %s189, 1
        %s280 = smul.addr %s279, 4
        %s281 = scalar_lea.vmem [#allocation3], %s280
        %p282 = scmp.lt.s32.totalorder %s24, 1
        %s283 = scalar_select %p282, %s24, 1
        %s284 = smul.addr %s283, 16
        %s285 = smul.addr %s284, 8
        %s286 = scalar_lea.vmem %s1, %s285
        %p287 = scmp.lt.s32.totalorder %s24, 1
        %s288 = scalar_select %p287, %s24, 1
        %s289 = smul.addr %s288, 4
        %s290 = smul.addr %s289, 8
        %s291 = scalar_lea.vmem %s6, %s290
        %v292 = vld [vmem:[%s2] sm:$0xff]
        %v293 = vld [vmem:[%s3] sm:$0xff]
        %v294 = vld [vmem:[%s4] sm:$0xff]
        %v295 = vld [vmem:[%s4 + $0x8] sm:$0xff]
        %v296 = vld [vmem:[%s4 + $0x10] sm:$0xff]
        %v297 = vld [vmem:[%s4 + $0x18] sm:$0xff]
        %v298 = vld [vmem:[%s4 + $0x20] sm:$0xff]
        %v299 = vld [vmem:[%s4 + $0x28] sm:$0xff]
        %v300 = vld [vmem:[%s4 + $0x30] sm:$0xff]
        %v301 = vld [vmem:[%s4 + $0x38] sm:$0xff]
        %v302 = vld [vmem:[%s4 + $0x40] sm:$0xff]
        %v303 = vld [vmem:[%s4 + $0x48] sm:$0xff]
        %v304 = vld [vmem:[%s4 + $0x50] sm:$0xff]
        %v305 = vld [vmem:[%s4 + $0x58] sm:$0xff]
        %v306 = vld [vmem:[%s4 + $0x60] sm:$0xff]
        %v307 = vld [vmem:[%s4 + $0x68] sm:$0xff]
        %v308 = vld [vmem:[%s4 + $0x70] sm:$0xff]
        %v309 = vld [vmem:[%s4 + $0x78] sm:$0xff]
        %v310 = vld [vmem:[%s4 + $0x80] sm:$0xff]
        %v311 = vld [vmem:[%s4 + $0x88] sm:$0xff]
        %v312 = vld [vmem:[%s4 + $0x90] sm:$0xff]
        %v313 = vld [vmem:[%s4 + $0x98] sm:$0xff]
        %v314 = vld [vmem:[%s4 + $0xa0] sm:$0xff]
        %v315 = vld [vmem:[%s4 + $0xa8] sm:$0xff]
        %v316 = vld [vmem:[%s4 + $0xb0] sm:$0xff]
        %v317 = vld [vmem:[%s4 + $0xb8] sm:$0xff]
        %v318 = vld [vmem:[%s4 + $0xc0] sm:$0xff]
        %v319 = vld [vmem:[%s4 + $0xc8] sm:$0xff]
        %v320 = vld [vmem:[%s4 + $0xd0] sm:$0xff]
        %v321 = vld [vmem:[%s4 + $0xd8] sm:$0xff]
        %v322 = vld [vmem:[%s4 + $0xe0] sm:$0xff]
        %v323 = vld [vmem:[%s4 + $0xe8] sm:$0xff]
        %v324 = vld [vmem:[%s4 + $0xf0] sm:$0xff]
        %v325 = vld [vmem:[%s4 + $0xf8] sm:$0xff]
        %v326 = vld [vmem:[%s4 + $0x100] sm:$0xff]
        %v327 = vld [vmem:[%s4 + $0x108] sm:$0xff]
        %v328 = vld [vmem:[%s4 + $0x110] sm:$0xff]
        %v329 = vld [vmem:[%s4 + $0x118] sm:$0xff]
        %v330 = vld [vmem:[%s4 + $0x120] sm:$0xff]
        %v331 = vld [vmem:[%s4 + $0x128] sm:$0xff]
        %v332 = vld [vmem:[%s4 + $0x130] sm:$0xff]
        %v333 = vld [vmem:[%s4 + $0x138] sm:$0xff]
        %v334 = vld [vmem:[%s4 + $0x140] sm:$0xff]
        %v335 = vld [vmem:[%s4 + $0x148] sm:$0xff]
        %v336 = vld [vmem:[%s4 + $0x150] sm:$0xff]
        %v337 = vld [vmem:[%s4 + $0x158] sm:$0xff]
        %v338 = vld [vmem:[%s4 + $0x160] sm:$0xff]
        %v339 = vld [vmem:[%s4 + $0x168] sm:$0xff]
        %v340 = vld [vmem:[%s4 + $0x170] sm:$0xff]
        %v341 = vld [vmem:[%s4 + $0x178] sm:$0xff]
        %v342 = vld [vmem:[%s4 + $0x180] sm:$0xff]
        %v343 = vld [vmem:[%s4 + $0x188] sm:$0xff]
        %v344 = vld [vmem:[%s4 + $0x190] sm:$0xff]
        %v345 = vld [vmem:[%s4 + $0x198] sm:$0xff]
        %v346 = vld [vmem:[%s4 + $0x1a0] sm:$0xff]
        %v347 = vld [vmem:[%s4 + $0x1a8] sm:$0xff]
        %v348 = vld [vmem:[%s4 + $0x1b0] sm:$0xff]
        %v349 = vld [vmem:[%s4 + $0x1b8] sm:$0xff]
        %v350 = vld [vmem:[%s4 + $0x1c0] sm:$0xff]
        %v351 = vld [vmem:[%s4 + $0x1c8] sm:$0xff]
        %v352 = vld [vmem:[%s4 + $0x1d0] sm:$0xff]
        %v353 = vld [vmem:[%s4 + $0x1d8] sm:$0xff]
        %v354 = vld [vmem:[%s4 + $0x1e0] sm:$0xff]
        %v355 = vld [vmem:[%s4 + $0x1e8] sm:$0xff]
        %v356 = vld [vmem:[%s4 + $0x1f0] sm:$0xff]
        %v357 = vld [vmem:[%s4 + $0x1f8] sm:$0xff]
        %v358 = vld [vmem:[%s5] sm:$0x1]
        %v359 = vld [vmem:[#allocation2] sm:$0x1]
        %v360 = vmul.f32 %v359, 1.442695
        %v361 = vpow.pop %v360
        %v362 = vld [vmem:[%s286] sm:$0xff]
        %v363 = vld [vmem:[%s286 + $0x8] sm:$0xff]
        %v364 = vld [vmem:[%s286 + $0x10] sm:$0xff]
        %v365 = vld [vmem:[%s286 + $0x18] sm:$0xff]
        %vm366 = vcmask 261120
        %v368 = vsel %vm366, %v292, 0
        %370 = vmatpush.msra.mxu0 0.0
        %371 = vmatpush.msra.mxu0 0.0
        %372 = vmatpush.msra.mxu0 0.0
        %373 = vmatpush.msra.mxu0 0.0
        %374 = vmatpush.msra.mxu0 0.0
        %375 = vmatpush.msra.mxu0 0.0
        %376 = vmatpush.msra.mxu0 0.0
        %377 = vmatpush.msra.mxu0 0.0
        %378 = vmatpush.msra.mxu0 0.0
        %379 = vmatpush.msra.mxu0 0.0
        %380 = vmatpush.msra.mxu0 0.0
        %381 = vmatpush.msra.mxu0 0.0
        %382 = vmatpush.msra.mxu0 %v365
        %383 = vmatpush.msra.mxu0 %v364
        %384 = vmatpush.msra.mxu0 %v363
        %385 = vmatpush.msra.mxu0 %v362
        %386 = vmatmul.f32.gmra.mxu0 %v368
        %v387 = vpop.f32.mrf.mxu0
        %v388 = vadd.f32 %v293, %v387
        %389 = vdwg.mxu0
        %v390 = vmax.f32 %v388, 0.0
        %vm391 = vcmask 523264
        %392 = vst.msk [vmem:[%s291] sm:$0xff] %vm391, %v390
        %v394 = vsel %vm391, %v390, 0
        %396 = vmatpush.msra.mxu0 0.0
        %397 = vmatpush.msra.mxu0 0.0
        %398 = vmatpush.msra.mxu0 0.0
        %399 = vmatpush.msra.mxu0 0.0
        %400 = vmatpush.msra.mxu0 0.0
        %401 = vmatpush.msra.mxu0 0.0
        %402 = vmatpush.msra.mxu0 0.0
        %403 = vmatpush.msra.mxu0 0.0
        %404 = vmatpush.msra.mxu0 %v301
        %405 = vmatpush.msra.mxu0 %v300
        %406 = vmatpush.msra.mxu0 %v299
        %407 = vmatpush.msra.mxu0 %v298
        %408 = vmatpush.msra.mxu0 %v297
        %409 = vmatpush.msra.mxu0 %v296
        %410 = vmatpush.msra.mxu0 %v295
        %411 = vmatpush.msra.mxu0 %v294
        %412 = vmatmul.f32.gmra.mxu0 %v394
        %v413 = vpop.f32.mrf.mxu0
        %v414 = vadd.f32 0.0, %v413
        %415 = vdwg.mxu0
        %v416 = vadd.f32 %v358, %v414
        %v417 = vrot.slane %v390, 1
        %v418 = vsel %vm391, %v417, 0
        %420 = vmatpush.msra.mxu0 0.0
        %421 = vmatpush.msra.mxu0 0.0
        %422 = vmatpush.msra.mxu0 0.0
        %423 = vmatpush.msra.mxu0 0.0
        %424 = vmatpush.msra.mxu0 0.0
        %425 = vmatpush.msra.mxu0 0.0
        %426 = vmatpush.msra.mxu0 0.0
        %427 = vmatpush.msra.mxu0 0.0
        %428 = vmatpush.msra.mxu0 %v309
        %429 = vmatpush.msra.mxu0 %v308
        %430 = vmatpush.msra.mxu0 %v307
        %431 = vmatpush.msra.mxu0 %v306
        %432 = vmatpush.msra.mxu0 %v305
        %433 = vmatpush.msra.mxu0 %v304
        %434 = vmatpush.msra.mxu0 %v303
        %435 = vmatpush.msra.mxu0 %v302
        %436 = vmatmul.f32.gmra.mxu0 %v418
        %v437 = vpop.f32.mrf.mxu0
        %v438 = vadd.f32 0.0, %v437
        %439 = vdwg.mxu0
        %v440 = vadd.f32 %v416, %v438
        %v441 = vrot.slane %v390, 2
        %v442 = vsel %vm391, %v441, 0
        %444 = vmatpush.msra.mxu0 0.0
        %445 = vmatpush.msra.mxu0 0.0
        %446 = vmatpush.msra.mxu0 0.0
        %447 = vmatpush.msra.mxu0 0.0
        %448 = vmatpush.msra.mxu0 0.0
        %449 = vmatpush.msra.mxu0 0.0
        %450 = vmatpush.msra.mxu0 0.0
        %451 = vmatpush.msra.mxu0 0.0
        %452 = vmatpush.msra.mxu0 %v317
        %453 = vmatpush.msra.mxu0 %v316
        %454 = vmatpush.msra.mxu0 %v315
        %455 = vmatpush.msra.mxu0 %v314
        %456 = vmatpush.msra.mxu0 %v313
        %457 = vmatpush.msra.mxu0 %v312
        %458 = vmatpush.msra.mxu0 %v311
        %459 = vmatpush.msra.mxu0 %v310
        %460 = vmatmul.f32.gmra.mxu0 %v442
        %v461 = vpop.f32.mrf.mxu0
        %v462 = vadd.f32 0.0, %v461
        %463 = vdwg.mxu0
        %v464 = vadd.f32 %v440, %v462
        %v465 = vrot.slane %v390, 3
        %v466 = vsel %vm391, %v465, 0
        %468 = vmatpush.msra.mxu0 0.0
        %469 = vmatpush.msra.mxu0 0.0
        %470 = vmatpush.msra.mxu0 0.0
        %471 = vmatpush.msra.mxu0 0.0
        %472 = vmatpush.msra.mxu0 0.0
        %473 = vmatpush.msra.mxu0 0.0
        %474 = vmatpush.msra.mxu0 0.0
        %475 = vmatpush.msra.mxu0 0.0
        %476 = vmatpush.msra.mxu0 %v325
        %477 = vmatpush.msra.mxu0 %v324
        %478 = vmatpush.msra.mxu0 %v323
        %479 = vmatpush.msra.mxu0 %v322
        %480 = vmatpush.msra.mxu0 %v321
        %481 = vmatpush.msra.mxu0 %v320
        %482 = vmatpush.msra.mxu0 %v319
        %483 = vmatpush.msra.mxu0 %v318
        %484 = vmatmul.f32.gmra.mxu0 %v466
        %v485 = vpop.f32.mrf.mxu0
        %v486 = vadd.f32 0.0, %v485
        %487 = vdwg.mxu0
        %v488 = vadd.f32 %v464, %v486
        %v489 = vrot.slane %v390, 4
        %v490 = vsel %vm391, %v489, 0
        %492 = vmatpush.msra.mxu0 0.0
        %493 = vmatpush.msra.mxu0 0.0
        %494 = vmatpush.msra.mxu0 0.0
        %495 = vmatpush.msra.mxu0 0.0
        %496 = vmatpush.msra.mxu0 0.0
        %497 = vmatpush.msra.mxu0 0.0
        %498 = vmatpush.msra.mxu0 0.0
        %499 = vmatpush.msra.mxu0 0.0
        %500 = vmatpush.msra.mxu0 %v333
        %501 = vmatpush.msra.mxu0 %v332
        %502 = vmatpush.msra.mxu0 %v331
        %503 = vmatpush.msra.mxu0 %v330
        %504 = vmatpush.msra.mxu0 %v329
        %505 = vmatpush.msra.mxu0 %v328
        %506 = vmatpush.msra.mxu0 %v327
        %507 = vmatpush.msra.mxu0 %v326
        %508 = vmatmul.f32.gmra.mxu0 %v490
        %v509 = vpop.f32.mrf.mxu0
        %v510 = vadd.f32 0.0, %v509
        %511 = vdwg.mxu0
        %v512 = vadd.f32 %v488, %v510
        %v513 = vrot.slane %v390, 5
        %v514 = vsel %vm391, %v513, 0
        %516 = vmatpush.msra.mxu0 0.0
        %517 = vmatpush.msra.mxu0 0.0
        %518 = vmatpush.msra.mxu0 0.0
        %519 = vmatpush.msra.mxu0 0.0
        %520 = vmatpush.msra.mxu0 0.0
        %521 = vmatpush.msra.mxu0 0.0
        %522 = vmatpush.msra.mxu0 0.0
        %523 = vmatpush.msra.mxu0 0.0
        %524 = vmatpush.msra.mxu0 %v341
        %525 = vmatpush.msra.mxu0 %v340
        %526 = vmatpush.msra.mxu0 %v339
        %527 = vmatpush.msra.mxu0 %v338
        %528 = vmatpush.msra.mxu0 %v337
        %529 = vmatpush.msra.mxu0 %v336
        %530 = vmatpush.msra.mxu0 %v335
        %531 = vmatpush.msra.mxu0 %v334
        %532 = vmatmul.f32.gmra.mxu0 %v514
        %v533 = vpop.f32.mrf.mxu0
        %v534 = vadd.f32 0.0, %v533
        %535 = vdwg.mxu0
        %v536 = vadd.f32 %v512, %v534
        %v537 = vrot.slane %v390, 6
        %v538 = vsel %vm391, %v537, 0
        %540 = vmatpush.msra.mxu0 0.0
        %541 = vmatpush.msra.mxu0 0.0
        %542 = vmatpush.msra.mxu0 0.0
        %543 = vmatpush.msra.mxu0 0.0
        %544 = vmatpush.msra.mxu0 0.0
        %545 = vmatpush.msra.mxu0 0.0
        %546 = vmatpush.msra.mxu0 0.0
        %547 = vmatpush.msra.mxu0 0.0
        %548 = vmatpush.msra.mxu0 %v349
        %549 = vmatpush.msra.mxu0 %v348
        %550 = vmatpush.msra.mxu0 %v347
        %551 = vmatpush.msra.mxu0 %v346
        %552 = vmatpush.msra.mxu0 %v345
        %553 = vmatpush.msra.mxu0 %v344
        %554 = vmatpush.msra.mxu0 %v343
        %555 = vmatpush.msra.mxu0 %v342
        %556 = vmatmul.f32.gmra.mxu0 %v538
        %v557 = vpop.f32.mrf.mxu0
        %v558 = vadd.f32 0.0, %v557
        %559 = vdwg.mxu0
        %v560 = vadd.f32 %v536, %v558
        %v561 = vrot.slane %v390, 7
        %v562 = vsel %vm391, %v561, 0
        %564 = vmatpush.msra.mxu0 0.0
        %565 = vmatpush.msra.mxu0 0.0
        %566 = vmatpush.msra.mxu0 0.0
        %567 = vmatpush.msra.mxu0 0.0
        %568 = vmatpush.msra.mxu0 0.0
        %569 = vmatpush.msra.mxu0 0.0
        %570 = vmatpush.msra.mxu0 0.0
        %571 = vmatpush.msra.mxu0 0.0
        %572 = vmatpush.msra.mxu0 %v357
        %573 = vmatpush.msra.mxu0 %v356
        %574 = vmatpush.msra.mxu0 %v355
        %575 = vmatpush.msra.mxu0 %v354
        %576 = vmatpush.msra.mxu0 %v353
        %577 = vmatpush.msra.mxu0 %v352
        %578 = vmatpush.msra.mxu0 %v351
        %579 = vmatpush.msra.mxu0 %v350
        %580 = vmatmul.f32.gmra.mxu0 %v562
        %v581 = vpop.f32.mrf.mxu0
        %v582 = vadd.f32 0.0, %v581
        %583 = vdwg.mxu0
        %v584 = vadd.f32 %v560, %v582
        %v585 = vmul.f32 %v584, %v584
        %vm586 = vcmask 253952
        %v587 = vsel %vm586, %v585, 0.0
        %588 = vadd.xlane.f32.xlu0 %v587
        %v589 = vpop.xlane.xlu0 %588
        %v590 = vrsqrt.pop %v589
        %v591 = vmul.f32 %v590, %v589
        %v592 = vmul.f32 %v591, %v590
        %v593 = vmul.f32 0.5, %v592
        %v594 = vsub.f32 1.5, %v593
        %v595 = vmul.f32 %v590, %v594
        %v596 = vmul.f32 %v589, %v595
        %vm597 = vcmp.eq.f32.partialorder %v589, inf
        %v598 = vsel %vm597, %v589, %v596
        %vm599 = vcmp.eq.f32.partialorder %v589, 0.0
        %v600 = vand.u32 %v589, 2147483648
        %v601 = vsel %vm599, %v600, %v598
        %v602 = vadd.f32 %v601, 1e-07
        %v603 = vrcp.pop %v602
        %v604 = vmul.f32 %v584, %v603
        %606 = vset.pattern.permute.xlu0 0
        %607 = vperm.xlu0 %606, %v361
        %v608 = vpop.permute.xlu0 %607
        %v610 = vperm.slane %v608, 0
        %v611 = vmul.f32 %v610, %v604
        %s612 = scalar_lea.vmem %s286, 32
        %v613 = vld [vmem:[%s612] sm:$0xff]
        %v614 = vld [vmem:[%s612 + $0x8] sm:$0xff]
        %v615 = vld [vmem:[%s612 + $0x10] sm:$0xff]
        %v616 = vld [vmem:[%s612 + $0x18] sm:$0xff]
        %617 = vmatpush.msra.mxu0 0.0
        %618 = vmatpush.msra.mxu0 0.0
        %619 = vmatpush.msra.mxu0 0.0
        %620 = vmatpush.msra.mxu0 0.0
        %621 = vmatpush.msra.mxu0 0.0
        %622 = vmatpush.msra.mxu0 0.0
        %623 = vmatpush.msra.mxu0 0.0
        %624 = vmatpush.msra.mxu0 0.0
        %625 = vmatpush.msra.mxu0 0.0
        %626 = vmatpush.msra.mxu0 0.0
        %627 = vmatpush.msra.mxu0 0.0
        %628 = vmatpush.msra.mxu0 0.0
        %629 = vmatpush.msra.mxu0 %v616
        %630 = vmatpush.msra.mxu0 %v615
        %631 = vmatpush.msra.mxu0 %v614
        %632 = vmatpush.msra.mxu0 %v613
        %633 = vmatmul.f32.gmra.mxu0 %v368
        %v634 = vpop.f32.mrf.mxu0
        %v635 = vadd.f32 %v293, %v634
        %636 = vdwg.mxu0
        %v637 = vmax.f32 %v635, 0.0
        %s638 = scalar_lea.vmem %s291, 8
        %639 = vst.msk [vmem:[%s638] sm:$0xff] %vm391, %v637
        %v641 = vsel %vm391, %v637, 0
        %643 = vmatpush.msra.mxu0 0.0
        %644 = vmatpush.msra.mxu0 0.0
        %645 = vmatpush.msra.mxu0 0.0
        %646 = vmatpush.msra.mxu0 0.0
        %647 = vmatpush.msra.mxu0 0.0
        %648 = vmatpush.msra.mxu0 0.0
        %649 = vmatpush.msra.mxu0 0.0
        %650 = vmatpush.msra.mxu0 0.0
        %651 = vmatpush.msra.mxu0 %v301
        %652 = vmatpush.msra.mxu0 %v300
        %653 = vmatpush.msra.mxu0 %v299
        %654 = vmatpush.msra.mxu0 %v298
        %655 = vmatpush.msra.mxu0 %v297
        %656 = vmatpush.msra.mxu0 %v296
        %657 = vmatpush.msra.mxu0 %v295
        %658 = vmatpush.msra.mxu0 %v294
        %659 = vmatmul.f32.gmra.mxu0 %v641
        %v660 = vpop.f32.mrf.mxu0
        %v661 = vadd.f32 0.0, %v660
        %662 = vdwg.mxu0
        %v663 = vadd.f32 %v358, %v661
        %v664 = vrot.slane %v637, 1
        %v665 = vsel %vm391, %v664, 0
        %667 = vmatpush.msra.mxu0 0.0
        %668 = vmatpush.msra.mxu0 0.0
        %669 = vmatpush.msra.mxu0 0.0
        %670 = vmatpush.msra.mxu0 0.0
        %671 = vmatpush.msra.mxu0 0.0
        %672 = vmatpush.msra.mxu0 0.0
        %673 = vmatpush.msra.mxu0 0.0
        %674 = vmatpush.msra.mxu0 0.0
        %675 = vmatpush.msra.mxu0 %v309
        %676 = vmatpush.msra.mxu0 %v308
        %677 = vmatpush.msra.mxu0 %v307
        %678 = vmatpush.msra.mxu0 %v306
        %679 = vmatpush.msra.mxu0 %v305
        %680 = vmatpush.msra.mxu0 %v304
        %681 = vmatpush.msra.mxu0 %v303
        %682 = vmatpush.msra.mxu0 %v302
        %683 = vmatmul.f32.gmra.mxu0 %v665
        %v684 = vpop.f32.mrf.mxu0
        %v685 = vadd.f32 0.0, %v684
        %686 = vdwg.mxu0
        %v687 = vadd.f32 %v663, %v685
        %v688 = vrot.slane %v637, 2
        %v689 = vsel %vm391, %v688, 0
        %691 = vmatpush.msra.mxu0 0.0
        %692 = vmatpush.msra.mxu0 0.0
        %693 = vmatpush.msra.mxu0 0.0
        %694 = vmatpush.msra.mxu0 0.0
        %695 = vmatpush.msra.mxu0 0.0
        %696 = vmatpush.msra.mxu0 0.0
        %697 = vmatpush.msra.mxu0 0.0
        %698 = vmatpush.msra.mxu0 0.0
        %699 = vmatpush.msra.mxu0 %v317
        %700 = vmatpush.msra.mxu0 %v316
        %701 = vmatpush.msra.mxu0 %v315
        %702 = vmatpush.msra.mxu0 %v314
        %703 = vmatpush.msra.mxu0 %v313
        %704 = vmatpush.msra.mxu0 %v312
        %705 = vmatpush.msra.mxu0 %v311
        %706 = vmatpush.msra.mxu0 %v310
        %707 = vmatmul.f32.gmra.mxu0 %v689
        %v708 = vpop.f32.mrf.mxu0
        %v709 = vadd.f32 0.0, %v708
        %710 = vdwg.mxu0
        %v711 = vadd.f32 %v687, %v709
        %v712 = vrot.slane %v637, 3
        %v713 = vsel %vm391, %v712, 0
        %715 = vmatpush.msra.mxu0 0.0
        %716 = vmatpush.msra.mxu0 0.0
        %717 = vmatpush.msra.mxu0 0.0
        %718 = vmatpush.msra.mxu0 0.0
        %719 = vmatpush.msra.mxu0 0.0
        %720 = vmatpush.msra.mxu0 0.0
        %721 = vmatpush.msra.mxu0 0.0
        %722 = vmatpush.msra.mxu0 0.0
        %723 = vmatpush.msra.mxu0 %v325
        %724 = vmatpush.msra.mxu0 %v324
        %725 = vmatpush.msra.mxu0 %v323
        %726 = vmatpush.msra.mxu0 %v322
        %727 = vmatpush.msra.mxu0 %v321
        %728 = vmatpush.msra.mxu0 %v320
        %729 = vmatpush.msra.mxu0 %v319
        %730 = vmatpush.msra.mxu0 %v318
        %731 = vmatmul.f32.gmra.mxu0 %v713
        %v732 = vpop.f32.mrf.mxu0
        %v733 = vadd.f32 0.0, %v732
        %734 = vdwg.mxu0
        %v735 = vadd.f32 %v711, %v733
        %v736 = vrot.slane %v637, 4
        %v737 = vsel %vm391, %v736, 0
        %739 = vmatpush.msra.mxu0 0.0
        %740 = vmatpush.msra.mxu0 0.0
        %741 = vmatpush.msra.mxu0 0.0
        %742 = vmatpush.msra.mxu0 0.0
        %743 = vmatpush.msra.mxu0 0.0
        %744 = vmatpush.msra.mxu0 0.0
        %745 = vmatpush.msra.mxu0 0.0
        %746 = vmatpush.msra.mxu0 0.0
        %747 = vmatpush.msra.mxu0 %v333
        %748 = vmatpush.msra.mxu0 %v332
        %749 = vmatpush.msra.mxu0 %v331
        %750 = vmatpush.msra.mxu0 %v330
        %751 = vmatpush.msra.mxu0 %v329
        %752 = vmatpush.msra.mxu0 %v328
        %753 = vmatpush.msra.mxu0 %v327
        %754 = vmatpush.msra.mxu0 %v326
        %755 = vmatmul.f32.gmra.mxu0 %v737
        %v756 = vpop.f32.mrf.mxu0
        %v757 = vadd.f32 0.0, %v756
        %758 = vdwg.mxu0
        %v759 = vadd.f32 %v735, %v757
        %v760 = vrot.slane %v637, 5
        %v761 = vsel %vm391, %v760, 0
        %763 = vmatpush.msra.mxu0 0.0
        %764 = vmatpush.msra.mxu0 0.0
        %765 = vmatpush.msra.mxu0 0.0
        %766 = vmatpush.msra.mxu0 0.0
        %767 = vmatpush.msra.mxu0 0.0
        %768 = vmatpush.msra.mxu0 0.0
        %769 = vmatpush.msra.mxu0 0.0
        %770 = vmatpush.msra.mxu0 0.0
        %771 = vmatpush.msra.mxu0 %v341
        %772 = vmatpush.msra.mxu0 %v340
        %773 = vmatpush.msra.mxu0 %v339
        %774 = vmatpush.msra.mxu0 %v338
        %775 = vmatpush.msra.mxu0 %v337
        %776 = vmatpush.msra.mxu0 %v336
        %777 = vmatpush.msra.mxu0 %v335
        %778 = vmatpush.msra.mxu0 %v334
        %779 = vmatmul.f32.gmra.mxu0 %v761
        %v780 = vpop.f32.mrf.mxu0
        %v781 = vadd.f32 0.0, %v780
        %782 = vdwg.mxu0
        %v783 = vadd.f32 %v759, %v781
        %v784 = vrot.slane %v637, 6
        %v785 = vsel %vm391, %v784, 0
        %787 = vmatpush.msra.mxu0 0.0
        %788 = vmatpush.msra.mxu0 0.0
        %789 = vmatpush.msra.mxu0 0.0
        %790 = vmatpush.msra.mxu0 0.0
        %791 = vmatpush.msra.mxu0 0.0
        %792 = vmatpush.msra.mxu0 0.0
        %793 = vmatpush.msra.mxu0 0.0
        %794 = vmatpush.msra.mxu0 0.0
        %795 = vmatpush.msra.mxu0 %v349
        %796 = vmatpush.msra.mxu0 %v348
        %797 = vmatpush.msra.mxu0 %v347
        %798 = vmatpush.msra.mxu0 %v346
        %799 = vmatpush.msra.mxu0 %v345
        %800 = vmatpush.msra.mxu0 %v344
        %801 = vmatpush.msra.mxu0 %v343
        %802 = vmatpush.msra.mxu0 %v342
        %803 = vmatmul.f32.gmra.mxu0 %v785
        %v804 = vpop.f32.mrf.mxu0
        %v805 = vadd.f32 0.0, %v804
        %806 = vdwg.mxu0
        %v807 = vadd.f32 %v783, %v805
        %v808 = vrot.slane %v637, 7
        %v809 = vsel %vm391, %v808, 0
        %811 = vmatpush.msra.mxu0 0.0
        %812 = vmatpush.msra.mxu0 0.0
        %813 = vmatpush.msra.mxu0 0.0
        %814 = vmatpush.msra.mxu0 0.0
        %815 = vmatpush.msra.mxu0 0.0
        %816 = vmatpush.msra.mxu0 0.0
        %817 = vmatpush.msra.mxu0 0.0
        %818 = vmatpush.msra.mxu0 0.0
        %819 = vmatpush.msra.mxu0 %v357
        %820 = vmatpush.msra.mxu0 %v356
        %821 = vmatpush.msra.mxu0 %v355
        %822 = vmatpush.msra.mxu0 %v354
        %823 = vmatpush.msra.mxu0 %v353
        %824 = vmatpush.msra.mxu0 %v352
        %825 = vmatpush.msra.mxu0 %v351
        %826 = vmatpush.msra.mxu0 %v350
        %827 = vmatmul.f32.gmra.mxu0 %v809
        %v828 = vpop.f32.mrf.mxu0
        %v829 = vadd.f32 0.0, %v828
        %830 = vdwg.mxu0
        %v831 = vadd.f32 %v807, %v829
        %v832 = vmul.f32 %v831, %v831
        %v833 = vsel %vm586, %v832, 0.0
        %834 = vadd.xlane.f32.xlu0 %v833
        %v835 = vpop.xlane.xlu0 %834
        %v836 = vrsqrt.pop %v835
        %v837 = vmul.f32 %v836, %v835
        %v838 = vmul.f32 %v837, %v836
        %v839 = vmul.f32 0.5, %v838
        %v840 = vsub.f32 1.5, %v839
        %v841 = vmul.f32 %v836, %v840
        %v842 = vmul.f32 %v835, %v841
        %vm843 = vcmp.eq.f32.partialorder %v835, inf
        %v844 = vsel %vm843, %v835, %v842
        %vm845 = vcmp.eq.f32.partialorder %v835, 0.0
        %v846 = vand.u32 %v835, 2147483648
        %v847 = vsel %vm845, %v846, %v844
        %v848 = vadd.f32 %v847, 1e-07
        %v849 = vrcp.pop %v848
        %v850 = vmul.f32 %v831, %v849
        %v851 = vmul.f32 %v610, %v850
        %s852 = scalar_lea.vmem %s286, 64
        %v853 = vld [vmem:[%s852] sm:$0xff]
        %v854 = vld [vmem:[%s852 + $0x8] sm:$0xff]
        %v855 = vld [vmem:[%s852 + $0x10] sm:$0xff]
        %v856 = vld [vmem:[%s852 + $0x18] sm:$0xff]
        %857 = vmatpush.msra.mxu0 0.0
        %858 = vmatpush.msra.mxu0 0.0
        %859 = vmatpush.msra.mxu0 0.0
        %860 = vmatpush.msra.mxu0 0.0
        %861 = vmatpush.msra.mxu0 0.0
        %862 = vmatpush.msra.mxu0 0.0
        %863 = vmatpush.msra.mxu0 0.0
        %864 = vmatpush.msra.mxu0 0.0
        %865 = vmatpush.msra.mxu0 0.0
        %866 = vmatpush.msra.mxu0 0.0
        %867 = vmatpush.msra.mxu0 0.0
        %868 = vmatpush.msra.mxu0 0.0
        %869 = vmatpush.msra.mxu0 %v856
        %870 = vmatpush.msra.mxu0 %v855
        %871 = vmatpush.msra.mxu0 %v854
        %872 = vmatpush.msra.mxu0 %v853
        %873 = vmatmul.f32.gmra.mxu0 %v368
        %v874 = vpop.f32.mrf.mxu0
        %v875 = vadd.f32 %v293, %v874
        %876 = vdwg.mxu0
        %v877 = vmax.f32 %v875, 0.0
        %s878 = scalar_lea.vmem %s291, 16
        %879 = vst.msk [vmem:[%s878] sm:$0xff] %vm391, %v877
        %v881 = vsel %vm391, %v877, 0
        %883 = vmatpush.msra.mxu0 0.0
        %884 = vmatpush.msra.mxu0 0.0
        %885 = vmatpush.msra.mxu0 0.0
        %886 = vmatpush.msra.mxu0 0.0
        %887 = vmatpush.msra.mxu0 0.0
        %888 = vmatpush.msra.mxu0 0.0
        %889 = vmatpush.msra.mxu0 0.0
        %890 = vmatpush.msra.mxu0 0.0
        %891 = vmatpush.msra.mxu0 %v301
        %892 = vmatpush.msra.mxu0 %v300
        %893 = vmatpush.msra.mxu0 %v299
        %894 = vmatpush.msra.mxu0 %v298
        %895 = vmatpush.msra.mxu0 %v297
        %896 = vmatpush.msra.mxu0 %v296
        %897 = vmatpush.msra.mxu0 %v295
        %898 = vmatpush.msra.mxu0 %v294
        %899 = vmatmul.f32.gmra.mxu0 %v881
        %v900 = vpop.f32.mrf.mxu0
        %v901 = vadd.f32 0.0, %v900
        %902 = vdwg.mxu0
        %v903 = vadd.f32 %v358, %v901
        %v904 = vrot.slane %v877, 1
        %v905 = vsel %vm391, %v904, 0
        %907 = vmatpush.msra.mxu0 0.0
        %908 = vmatpush.msra.mxu0 0.0
        %909 = vmatpush.msra.mxu0 0.0
        %910 = vmatpush.msra.mxu0 0.0
        %911 = vmatpush.msra.mxu0 0.0
        %912 = vmatpush.msra.mxu0 0.0
        %913 = vmatpush.msra.mxu0 0.0
        %914 = vmatpush.msra.mxu0 0.0
        %915 = vmatpush.msra.mxu0 %v309
        %916 = vmatpush.msra.mxu0 %v308
        %917 = vmatpush.msra.mxu0 %v307
        %918 = vmatpush.msra.mxu0 %v306
        %919 = vmatpush.msra.mxu0 %v305
        %920 = vmatpush.msra.mxu0 %v304
        %921 = vmatpush.msra.mxu0 %v303
        %922 = vmatpush.msra.mxu0 %v302
        %923 = vmatmul.f32.gmra.mxu0 %v905
        %v924 = vpop.f32.mrf.mxu0
        %v925 = vadd.f32 0.0, %v924
        %926 = vdwg.mxu0
        %v927 = vadd.f32 %v903, %v925
        %v928 = vrot.slane %v877, 2
        %v929 = vsel %vm391, %v928, 0
        %931 = vmatpush.msra.mxu0 0.0
        %932 = vmatpush.msra.mxu0 0.0
        %933 = vmatpush.msra.mxu0 0.0
        %934 = vmatpush.msra.mxu0 0.0
        %935 = vmatpush.msra.mxu0 0.0
        %936 = vmatpush.msra.mxu0 0.0
        %937 = vmatpush.msra.mxu0 0.0
        %938 = vmatpush.msra.mxu0 0.0
        %939 = vmatpush.msra.mxu0 %v317
        %940 = vmatpush.msra.mxu0 %v316
        %941 = vmatpush.msra.mxu0 %v315
        %942 = vmatpush.msra.mxu0 %v314
        %943 = vmatpush.msra.mxu0 %v313
        %944 = vmatpush.msra.mxu0 %v312
        %945 = vmatpush.msra.mxu0 %v311
        %946 = vmatpush.msra.mxu0 %v310
        %947 = vmatmul.f32.gmra.mxu0 %v929
        %v948 = vpop.f32.mrf.mxu0
        %v949 = vadd.f32 0.0, %v948
        %950 = vdwg.mxu0
        %v951 = vadd.f32 %v927, %v949
        %v952 = vrot.slane %v877, 3
        %v953 = vsel %vm391, %v952, 0
        %955 = vmatpush.msra.mxu0 0.0
        %956 = vmatpush.msra.mxu0 0.0
        %957 = vmatpush.msra.mxu0 0.0
        %958 = vmatpush.msra.mxu0 0.0
        %959 = vmatpush.msra.mxu0 0.0
        %960 = vmatpush.msra.mxu0 0.0
        %961 = vmatpush.msra.mxu0 0.0
        %962 = vmatpush.msra.mxu0 0.0
        %963 = vmatpush.msra.mxu0 %v325
        %964 = vmatpush.msra.mxu0 %v324
        %965 = vmatpush.msra.mxu0 %v323
        %966 = vmatpush.msra.mxu0 %v322
        %967 = vmatpush.msra.mxu0 %v321
        %968 = vmatpush.msra.mxu0 %v320
        %969 = vmatpush.msra.mxu0 %v319
        %970 = vmatpush.msra.mxu0 %v318
        %971 = vmatmul.f32.gmra.mxu0 %v953
        %v972 = vpop.f32.mrf.mxu0
        %v973 = vadd.f32 0.0, %v972
        %974 = vdwg.mxu0
        %v975 = vadd.f32 %v951, %v973
        %v976 = vrot.slane %v877, 4
        %v977 = vsel %vm391, %v976, 0
        %979 = vmatpush.msra.mxu0 0.0
        %980 = vmatpush.msra.mxu0 0.0
        %981 = vmatpush.msra.mxu0 0.0
        %982 = vmatpush.msra.mxu0 0.0
        %983 = vmatpush.msra.mxu0 0.0
        %984 = vmatpush.msra.mxu0 0.0
        %985 = vmatpush.msra.mxu0 0.0
        %986 = vmatpush.msra.mxu0 0.0
        %987 = vmatpush.msra.mxu0 %v333
        %988 = vmatpush.msra.mxu0 %v332
        %989 = vmatpush.msra.mxu0 %v331
        %990 = vmatpush.msra.mxu0 %v330
        %991 = vmatpush.msra.mxu0 %v329
        %992 = vmatpush.msra.mxu0 %v328
        %993 = vmatpush.msra.mxu0 %v327
        %994 = vmatpush.msra.mxu0 %v326
        %995 = vmatmul.f32.gmra.mxu0 %v977
        %v996 = vpop.f32.mrf.mxu0
        %v997 = vadd.f32 0.0, %v996
        %998 = vdwg.mxu0
        %v999 = vadd.f32 %v975, %v997
        %v1000 = vrot.slane %v877, 5
        %v1001 = vsel %vm391, %v1000, 0
        %1003 = vmatpush.msra.mxu0 0.0
        %1004 = vmatpush.msra.mxu0 0.0
        %1005 = vmatpush.msra.mxu0 0.0
        %1006 = vmatpush.msra.mxu0 0.0
        %1007 = vmatpush.msra.mxu0 0.0
        %1008 = vmatpush.msra.mxu0 0.0
        %1009 = vmatpush.msra.mxu0 0.0
        %1010 = vmatpush.msra.mxu0 0.0
        %1011 = vmatpush.msra.mxu0 %v341
        %1012 = vmatpush.msra.mxu0 %v340
        %1013 = vmatpush.msra.mxu0 %v339
        %1014 = vmatpush.msra.mxu0 %v338
        %1015 = vmatpush.msra.mxu0 %v337
        %1016 = vmatpush.msra.mxu0 %v336
        %1017 = vmatpush.msra.mxu0 %v335
        %1018 = vmatpush.msra.mxu0 %v334
        %1019 = vmatmul.f32.gmra.mxu0 %v1001
        %v1020 = vpop.f32.mrf.mxu0
        %v1021 = vadd.f32 0.0, %v1020
        %1022 = vdwg.mxu0
        %v1023 = vadd.f32 %v999, %v1021
        %v1024 = vrot.slane %v877, 6
        %v1025 = vsel %vm391, %v1024, 0
        %1027 = vmatpush.msra.mxu0 0.0
        %1028 = vmatpush.msra.mxu0 0.0
        %1029 = vmatpush.msra.mxu0 0.0
        %1030 = vmatpush.msra.mxu0 0.0
        %1031 = vmatpush.msra.mxu0 0.0
        %1032 = vmatpush.msra.mxu0 0.0
        %1033 = vmatpush.msra.mxu0 0.0
        %1034 = vmatpush.msra.mxu0 0.0
        %1035 = vmatpush.msra.mxu0 %v349
        %1036 = vmatpush.msra.mxu0 %v348
        %1037 = vmatpush.msra.mxu0 %v347
        %1038 = vmatpush.msra.mxu0 %v346
        %1039 = vmatpush.msra.mxu0 %v345
        %1040 = vmatpush.msra.mxu0 %v344
        %1041 = vmatpush.msra.mxu0 %v343
        %1042 = vmatpush.msra.mxu0 %v342
        %1043 = vmatmul.f32.gmra.mxu0 %v1025
        %v1044 = vpop.f32.mrf.mxu0
        %v1045 = vadd.f32 0.0, %v1044
        %1046 = vdwg.mxu0
        %v1047 = vadd.f32 %v1023, %v1045
        %v1048 = vrot.slane %v877, 7
        %v1049 = vsel %vm391, %v1048, 0
        %1051 = vmatpush.msra.mxu0 0.0
        %1052 = vmatpush.msra.mxu0 0.0
        %1053 = vmatpush.msra.mxu0 0.0
        %1054 = vmatpush.msra.mxu0 0.0
        %1055 = vmatpush.msra.mxu0 0.0
        %1056 = vmatpush.msra.mxu0 0.0
        %1057 = vmatpush.msra.mxu0 0.0
        %1058 = vmatpush.msra.mxu0 0.0
        %1059 = vmatpush.msra.mxu0 %v357
        %1060 = vmatpush.msra.mxu0 %v356
        %1061 = vmatpush.msra.mxu0 %v355
        %1062 = vmatpush.msra.mxu0 %v354
        %1063 = vmatpush.msra.mxu0 %v353
        %1064 = vmatpush.msra.mxu0 %v352
        %1065 = vmatpush.msra.mxu0 %v351
        %1066 = vmatpush.msra.mxu0 %v350
        %1067 = vmatmul.f32.gmra.mxu0 %v1049
        %v1068 = vpop.f32.mrf.mxu0
        %v1069 = vadd.f32 0.0, %v1068
        %1070 = vdwg.mxu0
        %v1071 = vadd.f32 %v1047, %v1069
        %v1072 = vmul.f32 %v1071, %v1071
        %v1073 = vsel %vm586, %v1072, 0.0
        %1074 = vadd.xlane.f32.xlu0 %v1073
        %v1075 = vpop.xlane.xlu0 %1074
        %v1076 = vrsqrt.pop %v1075
        %v1077 = vmul.f32 %v1076, %v1075
        %v1078 = vmul.f32 %v1077, %v1076
        %v1079 = vmul.f32 0.5, %v1078
        %v1080 = vsub.f32 1.5, %v1079
        %v1081 = vmul.f32 %v1076, %v1080
        %v1082 = vmul.f32 %v1075, %v1081
        %vm1083 = vcmp.eq.f32.partialorder %v1075, inf
        %v1084 = vsel %vm1083, %v1075, %v1082
        %vm1085 = vcmp.eq.f32.partialorder %v1075, 0.0
        %v1086 = vand.u32 %v1075, 2147483648
        %v1087 = vsel %vm1085, %v1086, %v1084
        %v1088 = vadd.f32 %v1087, 1e-07
        %v1089 = vrcp.pop %v1088
        %v1090 = vmul.f32 %v1071, %v1089
        %v1091 = vmul.f32 %v610, %v1090
        %s1092 = scalar_lea.vmem %s286, 96
        %v1093 = vld [vmem:[%s1092] sm:$0xff]
        %v1094 = vld [vmem:[%s1092 + $0x8] sm:$0xff]
        %v1095 = vld [vmem:[%s1092 + $0x10] sm:$0xff]
        %v1096 = vld [vmem:[%s1092 + $0x18] sm:$0xff]
        %1097 = vmatpush.msra.mxu0 0.0
        %1098 = vmatpush.msra.mxu0 0.0
        %1099 = vmatpush.msra.mxu0 0.0
        %1100 = vmatpush.msra.mxu0 0.0
        %1101 = vmatpush.msra.mxu0 0.0
        %1102 = vmatpush.msra.mxu0 0.0
        %1103 = vmatpush.msra.mxu0 0.0
        %1104 = vmatpush.msra.mxu0 0.0
        %1105 = vmatpush.msra.mxu0 0.0
        %1106 = vmatpush.msra.mxu0 0.0
        %1107 = vmatpush.msra.mxu0 0.0
        %1108 = vmatpush.msra.mxu0 0.0
        %1109 = vmatpush.msra.mxu0 %v1096
        %1110 = vmatpush.msra.mxu0 %v1095
        %1111 = vmatpush.msra.mxu0 %v1094
        %1112 = vmatpush.msra.mxu0 %v1093
        %1113 = vmatmul.f32.gmra.mxu0 %v368
        %v1114 = vpop.f32.mrf.mxu0
        %v1115 = vadd.f32 %v293, %v1114
        %1116 = vdwg.mxu0
        %v1117 = vmax.f32 %v1115, 0.0
        %s1118 = scalar_lea.vmem %s291, 24
        %1119 = vst.msk [vmem:[%s1118] sm:$0xff] %vm391, %v1117
        %v1121 = vsel %vm391, %v1117, 0
        %1123 = vmatpush.msra.mxu0 0.0
        %1124 = vmatpush.msra.mxu0 0.0
        %1125 = vmatpush.msra.mxu0 0.0
        %1126 = vmatpush.msra.mxu0 0.0
        %1127 = vmatpush.msra.mxu0 0.0
        %1128 = vmatpush.msra.mxu0 0.0
        %1129 = vmatpush.msra.mxu0 0.0
        %1130 = vmatpush.msra.mxu0 0.0
        %1131 = vmatpush.msra.mxu0 %v301
        %1132 = vmatpush.msra.mxu0 %v300
        %1133 = vmatpush.msra.mxu0 %v299
        %1134 = vmatpush.msra.mxu0 %v298
        %1135 = vmatpush.msra.mxu0 %v297
        %1136 = vmatpush.msra.mxu0 %v296
        %1137 = vmatpush.msra.mxu0 %v295
        %1138 = vmatpush.msra.mxu0 %v294
        %1139 = vmatmul.f32.gmra.mxu0 %v1121
        %v1140 = vpop.f32.mrf.mxu0
        %v1141 = vadd.f32 0.0, %v1140
        %1142 = vdwg.mxu0
        %v1143 = vadd.f32 %v358, %v1141
        %v1144 = vrot.slane %v1117, 1
        %v1145 = vsel %vm391, %v1144, 0
        %1147 = vmatpush.msra.mxu0 0.0
        %1148 = vmatpush.msra.mxu0 0.0
        %1149 = vmatpush.msra.mxu0 0.0
        %1150 = vmatpush.msra.mxu0 0.0
        %1151 = vmatpush.msra.mxu0 0.0
        %1152 = vmatpush.msra.mxu0 0.0
        %1153 = vmatpush.msra.mxu0 0.0
        %1154 = vmatpush.msra.mxu0 0.0
        %1155 = vmatpush.msra.mxu0 %v309
        %1156 = vmatpush.msra.mxu0 %v308
        %1157 = vmatpush.msra.mxu0 %v307
        %1158 = vmatpush.msra.mxu0 %v306
        %1159 = vmatpush.msra.mxu0 %v305
        %1160 = vmatpush.msra.mxu0 %v304
        %1161 = vmatpush.msra.mxu0 %v303
        %1162 = vmatpush.msra.mxu0 %v302
        %1163 = vmatmul.f32.gmra.mxu0 %v1145
        %v1164 = vpop.f32.mrf.mxu0
        %v1165 = vadd.f32 0.0, %v1164
        %1166 = vdwg.mxu0
        %v1167 = vadd.f32 %v1143, %v1165
        %v1168 = vrot.slane %v1117, 2
        %v1169 = vsel %vm391, %v1168, 0
        %1171 = vmatpush.msra.mxu0 0.0
        %1172 = vmatpush.msra.mxu0 0.0
        %1173 = vmatpush.msra.mxu0 0.0
        %1174 = vmatpush.msra.mxu0 0.0
        %1175 = vmatpush.msra.mxu0 0.0
        %1176 = vmatpush.msra.mxu0 0.0
        %1177 = vmatpush.msra.mxu0 0.0
        %1178 = vmatpush.msra.mxu0 0.0
        %1179 = vmatpush.msra.mxu0 %v317
        %1180 = vmatpush.msra.mxu0 %v316
        %1181 = vmatpush.msra.mxu0 %v315
        %1182 = vmatpush.msra.mxu0 %v314
        %1183 = vmatpush.msra.mxu0 %v313
        %1184 = vmatpush.msra.mxu0 %v312
        %1185 = vmatpush.msra.mxu0 %v311
        %1186 = vmatpush.msra.mxu0 %v310
        %1187 = vmatmul.f32.gmra.mxu0 %v1169
        %v1188 = vpop.f32.mrf.mxu0
        %v1189 = vadd.f32 0.0, %v1188
        %1190 = vdwg.mxu0
        %v1191 = vadd.f32 %v1167, %v1189
        %v1192 = vrot.slane %v1117, 3
        %v1193 = vsel %vm391, %v1192, 0
        %1195 = vmatpush.msra.mxu0 0.0
        %1196 = vmatpush.msra.mxu0 0.0
        %1197 = vmatpush.msra.mxu0 0.0
        %1198 = vmatpush.msra.mxu0 0.0
        %1199 = vmatpush.msra.mxu0 0.0
        %1200 = vmatpush.msra.mxu0 0.0
        %1201 = vmatpush.msra.mxu0 0.0
        %1202 = vmatpush.msra.mxu0 0.0
        %1203 = vmatpush.msra.mxu0 %v325
        %1204 = vmatpush.msra.mxu0 %v324
        %1205 = vmatpush.msra.mxu0 %v323
        %1206 = vmatpush.msra.mxu0 %v322
        %1207 = vmatpush.msra.mxu0 %v321
        %1208 = vmatpush.msra.mxu0 %v320
        %1209 = vmatpush.msra.mxu0 %v319
        %1210 = vmatpush.msra.mxu0 %v318
        %1211 = vmatmul.f32.gmra.mxu0 %v1193
        %v1212 = vpop.f32.mrf.mxu0
        %v1213 = vadd.f32 0.0, %v1212
        %1214 = vdwg.mxu0
        %v1215 = vadd.f32 %v1191, %v1213
        %v1216 = vrot.slane %v1117, 4
        %v1217 = vsel %vm391, %v1216, 0
        %1219 = vmatpush.msra.mxu0 0.0
        %1220 = vmatpush.msra.mxu0 0.0
        %1221 = vmatpush.msra.mxu0 0.0
        %1222 = vmatpush.msra.mxu0 0.0
        %1223 = vmatpush.msra.mxu0 0.0
        %1224 = vmatpush.msra.mxu0 0.0
        %1225 = vmatpush.msra.mxu0 0.0
        %1226 = vmatpush.msra.mxu0 0.0
        %1227 = vmatpush.msra.mxu0 %v333
        %1228 = vmatpush.msra.mxu0 %v332
        %1229 = vmatpush.msra.mxu0 %v331
        %1230 = vmatpush.msra.mxu0 %v330
        %1231 = vmatpush.msra.mxu0 %v329
        %1232 = vmatpush.msra.mxu0 %v328
        %1233 = vmatpush.msra.mxu0 %v327
        %1234 = vmatpush.msra.mxu0 %v326
        %1235 = vmatmul.f32.gmra.mxu0 %v1217
        %v1236 = vpop.f32.mrf.mxu0
        %v1237 = vadd.f32 0.0, %v1236
        %1238 = vdwg.mxu0
        %v1239 = vadd.f32 %v1215, %v1237
        %v1240 = vrot.slane %v1117, 5
        %v1241 = vsel %vm391, %v1240, 0
        %1243 = vmatpush.msra.mxu0 0.0
        %1244 = vmatpush.msra.mxu0 0.0
        %1245 = vmatpush.msra.mxu0 0.0
        %1246 = vmatpush.msra.mxu0 0.0
        %1247 = vmatpush.msra.mxu0 0.0
        %1248 = vmatpush.msra.mxu0 0.0
        %1249 = vmatpush.msra.mxu0 0.0
        %1250 = vmatpush.msra.mxu0 0.0
        %1251 = vmatpush.msra.mxu0 %v341
        %1252 = vmatpush.msra.mxu0 %v340
        %1253 = vmatpush.msra.mxu0 %v339
        %1254 = vmatpush.msra.mxu0 %v338
        %1255 = vmatpush.msra.mxu0 %v337
        %1256 = vmatpush.msra.mxu0 %v336
        %1257 = vmatpush.msra.mxu0 %v335
        %1258 = vmatpush.msra.mxu0 %v334
        %1259 = vmatmul.f32.gmra.mxu0 %v1241
        %v1260 = vpop.f32.mrf.mxu0
        %v1261 = vadd.f32 0.0, %v1260
        %1262 = vdwg.mxu0
        %v1263 = vadd.f32 %v1239, %v1261
        %v1264 = vrot.slane %v1117, 6
        %v1265 = vsel %vm391, %v1264, 0
        %1267 = vmatpush.msra.mxu0 0.0
        %1268 = vmatpush.msra.mxu0 0.0
        %1269 = vmatpush.msra.mxu0 0.0
        %1270 = vmatpush.msra.mxu0 0.0
        %1271 = vmatpush.msra.mxu0 0.0
        %1272 = vmatpush.msra.mxu0 0.0
        %1273 = vmatpush.msra.mxu0 0.0
        %1274 = vmatpush.msra.mxu0 0.0
        %1275 = vmatpush.msra.mxu0 %v349
        %1276 = vmatpush.msra.mxu0 %v348
        %1277 = vmatpush.msra.mxu0 %v347
        %1278 = vmatpush.msra.mxu0 %v346
        %1279 = vmatpush.msra.mxu0 %v345
        %1280 = vmatpush.msra.mxu0 %v344
        %1281 = vmatpush.msra.mxu0 %v343
        %1282 = vmatpush.msra.mxu0 %v342
        %1283 = vmatmul.f32.gmra.mxu0 %v1265
        %v1284 = vpop.f32.mrf.mxu0
        %v1285 = vadd.f32 0.0, %v1284
        %1286 = vdwg.mxu0
        %v1287 = vadd.f32 %v1263, %v1285
        %v1288 = vrot.slane %v1117, 7
        %v1289 = vsel %vm391, %v1288, 0
        %1291 = vmatpush.msra.mxu0 0.0
        %1292 = vmatpush.msra.mxu0 0.0
        %1293 = vmatpush.msra.mxu0 0.0
        %1294 = vmatpush.msra.mxu0 0.0
        %1295 = vmatpush.msra.mxu0 0.0
        %1296 = vmatpush.msra.mxu0 0.0
        %1297 = vmatpush.msra.mxu0 0.0
        %1298 = vmatpush.msra.mxu0 0.0
        %1299 = vmatpush.msra.mxu0 %v357
        %1300 = vmatpush.msra.mxu0 %v356
        %1301 = vmatpush.msra.mxu0 %v355
        %1302 = vmatpush.msra.mxu0 %v354
        %1303 = vmatpush.msra.mxu0 %v353
        %1304 = vmatpush.msra.mxu0 %v352
        %1305 = vmatpush.msra.mxu0 %v351
        %1306 = vmatpush.msra.mxu0 %v350
        %1307 = vmatmul.f32.gmra.mxu0 %v1289
        %v1308 = vpop.f32.mrf.mxu0
        %v1309 = vadd.f32 0.0, %v1308
        %1310 = vdwg.mxu0
        %v1311 = vadd.f32 %v1287, %v1309
        %v1312 = vmul.f32 %v1311, %v1311
        %v1313 = vsel %vm586, %v1312, 0.0
        %1314 = vadd.xlane.f32.xlu0 %v1313
        %v1315 = vpop.xlane.xlu0 %1314
        %v1316 = vrsqrt.pop %v1315
        %v1317 = vmul.f32 %v1316, %v1315
        %v1318 = vmul.f32 %v1317, %v1316
        %v1319 = vmul.f32 0.5, %v1318
        %v1320 = vsub.f32 1.5, %v1319
        %v1321 = vmul.f32 %v1316, %v1320
        %v1322 = vmul.f32 %v1315, %v1321
        %vm1323 = vcmp.eq.f32.partialorder %v1315, inf
        %v1324 = vsel %vm1323, %v1315, %v1322
        %vm1325 = vcmp.eq.f32.partialorder %v1315, 0.0
        %v1326 = vand.u32 %v1315, 2147483648
        %v1327 = vsel %vm1325, %v1326, %v1324
        %v1328 = vadd.f32 %v1327, 1e-07
        %v1329 = vrcp.pop %v1328
        %v1330 = vmul.f32 %v1311, %v1329
        %v1331 = vmul.f32 %v610, %v1330
        %v1333 = vperm.slane %v851, 0
        %v1336 = vperm.slane %v1091, 0
        %v1339 = vperm.slane %v1331, 0
        %vm1341 = vcmask 1040384
        %v1342 = vsel %vm1341, %v611, %v1333
        %vm1343 = vcmask 1041408
        %v1344 = vsel %vm1343, %v1342, %v1336
        %vm1345 = vcmask 1042432
        %v1346 = vsel %vm1345, %v1344, %v1339
        %vm1347 = vcmask 257024
        %1348 = vst.msk [vmem:[%s281] sm:$0xf] %vm1347, %v1346
        %p1349 = scmp.lt.s32.totalorder %s24, 1
        %s1350 = scalar_select %p1349, %s24, 1
        %s1351 = smul.addr %s1350, 4
        %s1352 = smul.addr %s1351, 8
        %s1353 = scalar_lea.vmem %s6, %s1352
        %s1354 = sand.u32 %s189, 1
        %s1355 = scalar_lea.sflag [#allocation4], %s1354
        %s1356 = sand.u32 %s189, 1
        %s1357 = smul.addr %s1356, 4
        %s1358 = scalar_lea.vmem [#allocation3], %s1357
        // Predicated region
        $region45: #{_forward_impl.1} parent=43 // pred_check
          %p1359 = pneg %p173
        $region46: #{_forward_impl.1} parent=43 // pred_check_branch
          %1361 = sbr.rel (%p1359) target = $region48
        $region47: #{_forward_impl.1} parent=43 // pred_region
          _
        $region48: #{_forward_impl.1} parent=43 // pred_fallthru
          _
        // Predicated region
        $region49: #{_forward_impl.1} parent=43 // pred_check
          %p1362 = pneg %p199
        $region50: #{_forward_impl.1} parent=43 // pred_check_branch
          %1364 = sbr.rel (%p1362) target = $region52
        $region51: #{_forward_impl.1} parent=43 // pred_region
          %1366 = vsyncadd %s1355, 0
          %s1367 = smul.addr %s24, 4
          %s1368 = scalar_lea.hbm %s7, %s1367
          %s1370 = sshll.u32 %s1358, 4
          %s1371 = int_to_ptr.vmem [resolvable:$true] %s1370
          %s1372 = sshll.u32 %s1368, 4
          %s1373 = int_to_ptr.hbm [resolvable:$true] %s1372
          %1375 = dma.vmem_to_hbm [thread:$0]  %s1371, 64, %s1373, %s1355
        $region52: #{_forward_impl.1} parent=43 // pred_fallthru
          _
      $region44: #{_forward_impl.1} parent=5 // pred_fallthru
        _
      %p1376 = scmp.le.s32.totalorder 2, %s19
      // Predicated region
      $region53: #{_forward_impl.1} parent=5 // pred_check
        %p1377 = pneg %p1376
      $region54: #{_forward_impl.1} parent=5 // pred_check_branch
        %1379 = sbr.rel (%p1377) target = $region56
      $region55: #{_forward_impl.1} parent=5 // pred_region
        %s1380 = ssub.s32 %s19, 2
        // Predicated region
        $region57: #{_forward_impl.1} parent=55 // pred_check
          %p1381 = pneg %p179
        $region58: #{_forward_impl.1} parent=55 // pred_check_branch
          %1383 = sbr.rel (%p1381) target = $region60
        $region59: #{_forward_impl.1} parent=55 // pred_region
          %p1384 = scmp.lt.s32.totalorder %s25, 1
          %s1385 = scalar_select %p1384, %s25, 1
          %s1386 = smul.addr %s1385, 4
          %s1387 = smul.addr %s1386, 8
          %s1388 = scalar_lea.vmem %s6, %s1387
        $region60: #{_forward_impl.1} parent=55 // pred_fallthru
          _
        // Predicated region
        $region61: #{_forward_impl.1} parent=55 // pred_check
          %p1389 = pneg %p205
        $region62: #{_forward_impl.1} parent=55 // pred_check_branch
          %1391 = sbr.rel (%p1389) target = $region64
        $region63: #{_forward_impl.1} parent=55 // pred_region
          %s1392 = sand.u32 %s190, 1
          %s1393 = scalar_lea.sflag [#allocation4], %s1392
          %s1394 = sand.u32 %s190, 1
          %s1395 = smul.addr %s1394, 4
          %s1396 = scalar_lea.vmem [#allocation3], %s1395
          %1398 = dma.done %s1393, 64
        $region64: #{_forward_impl.1} parent=55 // pred_fallthru
          _
      $region56: #{_forward_impl.1} parent=5 // pred_fallthru
        _
    $region6: #{_forward_impl.1} parent=1 // loop_footer
      %s23 = sadd.s32 1, %s19
    $region7: #{_forward_impl.1} parent=1 // loop_footer_branch
      %18 = sbr.rel target = $region3
    $region8: #{_forward_impl.1} parent=1 // loop_exit
      _
    %1399 = vsyncpa [#allocation4], 1
    %s1400 = scalar_lea.sflag [#allocation4], 1
    %1401 = vsyncpa %s1400, 1

</llo_original>
